<compile_context>
chip_gen: v6e
topology: v6e:2x2x1
jax: 0.10.0
libtpu: 0.0.40
codegen_flags: <defaults>
</compile_context>

<pallas_src>
import jax
import jax.numpy as jnp
from jax.experimental import pallas as pl
from jax.experimental.pallas import tpu as pltpu

LANE = 128  # per-gate lane tile width (also the lane-dense output width)


def _make_gru_clf_kernel(T, B_pad, H):
    f32 = jnp.float32
    L = LANE
    GN = 3 * L  # r | z | n, one 128-lane tile per gate

    def kernel(x_ref,          # (T*B_pad, 2D)   rows = [x[t,b] | x[T-1-t,b]]
               wih_ref,        # (2D, 384)       packed input->hidden weights
               whh_ref,        # (128, 384)      packed block-diag hidden->hidden
               whead_ref,      # (256, 128)      rows 0..127 fwd head, 128..255 bwd head
               bias_ref,       # (3, 384)        row0: gi bias, row1: b_hn, row2: head bias
               out_ref,        # (T*B_pad, 128)  lane-dense, cols 0/1 = start/end logits
               gi_ref,         # scratch (T*B_pad, 384)
               ff_ref,         # scratch (T*B_pad, 128)  fwd-time-ordered features
               fb_ref):        # scratch (T*B_pad, 128)  bwd features stored at real time t
        # --- hoisted input projection: both directions, all 3 gates, one matmul ---
        gi_ref[...] = (jnp.dot(x_ref[...], wih_ref[...], preferred_element_type=f32)
                       + bias_ref[0:1, :])

        # Hoist recurrent weights and the b_hn broadcast out of the loop
        # (JAX does not CSE broadcast_in_dim).
        whh = whh_ref[...]
        bnh = jnp.broadcast_to(bias_ref[1:2, 0:L], (B_pad, L))
        h0 = jnp.zeros((B_pad, L), f32)

        def step(t, h):
            # Sublane-tile-aligned row offsets (B_pad is a multiple of 8).
            row_f = pl.multiple_of(t * B_pad, 8)
            row_b = pl.multiple_of((T - 1 - t) * B_pad, 8)

            gi = gi_ref[pl.ds(row_f, B_pad), :]                          # (B_pad, 384)
            # Single MXU push for both directions / all gates.
            gh = jnp.dot(h, whh, preferred_element_type=f32)             # (B_pad, 384)

            # PyTorch gate order [r | z | n]; each gate is its own 128-lane tile.
            rz = jax.nn.sigmoid(gi[:, 0:2 * L] + gh[:, 0:2 * L])
            r = rz[:, 0:L]
            z = rz[:, L:2 * L]
            # b_hn stays inside r * (...) as in PyTorch.
            n = jnp.tanh(gi[:, 2 * L:3 * L] + r * (gh[:, 2 * L:3 * L] + bnh))
            h_new = (1.0 - z) * n + z * h

            # fwd half is the t-th output; bwd half is the (T-1-t)-th output.
            ff_ref[pl.ds(row_f, B_pad), :] = h_new
            fb_ref[pl.ds(row_b, B_pad), :] = h_new
            return h_new

        # T is small & static -> fully unroll so the scheduler overlaps steps.
        jax.lax.fori_loop(0, T, step, h0, unroll=True)

        # LeakyReLU(0.01) + both linear heads as lane-dense matmuls.
        # whead rows pick out the relevant lane halves (fwd rows 0..H-1 of the
        # first block, bwd rows H..2H-1 of the second block), so the irrelevant
        # lanes of ff / fb contribute nothing.
        ff = ff_ref[...]
        ff = jnp.where(ff >= 0.0, ff, 0.01 * ff)
        fb = fb_ref[...]
        fb = jnp.where(fb >= 0.0, fb, 0.01 * fb)
        out_ref[...] = (jnp.dot(ff, whead_ref[0:L, :], preferred_element_type=f32)
                        + jnp.dot(fb, whead_ref[L:2 * L, :], preferred_element_type=f32)
                        + bias_ref[2:3, 0:L])

    return kernel


def gru_clf_forward(feat, params):
    """feat: (B, T, D) float32 -> (B, T, 2) float32."""
    B, T, D = feat.shape
    assert D % 2 == 0
    H = D // 2
    f32 = jnp.float32
    L = LANE
    GN = 3 * L
    B_pad = ((B + 7) // 8) * 8        # sublane-tile-aligned batch

    # --- input: rows = t*B_pad + b, cols = [x[t,b,:] (D) | x[T-1-t,b,:] (D)] ---
    xf = jnp.transpose(feat, (1, 0, 2)).astype(f32)          # (T, B, D) time-major
    xb = xf[::-1]                                            # time-reversed copy
    x_cat = jnp.concatenate([xf, xb], axis=-1)               # (T, B, 2D)
    x_cat = jnp.pad(x_cat, ((0, 0), (0, B_pad - B), (0, 0)))
    x2d = x_cat.reshape(T * B_pad, 2 * D)

    def gates_w(w):   # (3H, X) -> three (X, H) matrices in PyTorch [r|z|n] order
        return w[0:H].T, w[H:2 * H].T, w[2 * H:3 * H].T

    def gates_b(b):   # (3H,) -> three (H,)
        return b[0:H], b[H:2 * H], b[2 * H:3 * H]

    wir_f, wiz_f, win_f = gates_w(params["wih_f"].astype(f32))
    whr_f, whz_f, whn_f = gates_w(params["whh_f"].astype(f32))
    bir_f, biz_f, bin_f = gates_b(params["bih_f"].astype(f32))
    bhr_f, bhz_f, bhn_f = gates_b(params["bhh_f"].astype(f32))
    wir_b, wiz_b, win_b = gates_w(params["wih_b"].astype(f32))
    whr_b, whz_b, whn_b = gates_w(params["whh_b"].astype(f32))
    bir_b, biz_b, bin_b = gates_b(params["bih_b"].astype(f32))
    bhr_b, bhz_b, bhn_b = gates_b(params["bhh_b"].astype(f32))

    # --- packed W_ih: (2D, 384).  gate g sits at lanes [g*128, g*128+2H);
    #     fwd weights use input rows 0..D-1, bwd weights use rows D..2D-1. ---
    wih = jnp.zeros((2 * D, GN), f32)
    for g, (wf, wb) in enumerate(((wir_f, wir_b), (wiz_f, wiz_b), (win_f, win_b))):
        wih = wih.at[0:D, g * L:g * L + H].set(wf)
        wih = wih.at[D:2 * D, g * L + H:g * L + 2 * H].set(wb)

    # --- packed block-diagonal W_hh: (128, 384); hidden lanes 0..H-1 fwd, H..2H-1 bwd ---
    whh = jnp.zeros((L, GN), f32)
    for g, (wf, wb) in enumerate(((whr_f, whr_b), (whz_f, whz_b), (whn_f, whn_b))):
        whh = whh.at[0:H, g * L:g * L + H].set(wf)
        whh = whh.at[H:2 * H, g * L + H:g * L + 2 * H].set(wb)

    # --- bias block (3, 384):
    #     row 0: gi bias (b_ih+b_hh folded for r/z; only b_in for n),
    #     row 1: b_hn (fwd | bwd) in lanes 0..2H-1,
    #     row 2: head bias (b_s, b_e) in lanes 0/1. ---
    bias = jnp.zeros((3, GN), f32)
    bias = bias.at[0, 0 * L:0 * L + H].set(bir_f + bhr_f)
    bias = bias.at[0, 0 * L + H:0 * L + 2 * H].set(bir_b + bhr_b)
    bias = bias.at[0, 1 * L:1 * L + H].set(biz_f + bhz_f)
    bias = bias.at[0, 1 * L + H:1 * L + 2 * H].set(biz_b + bhz_b)
    bias = bias.at[0, 2 * L:2 * L + H].set(bin_f)
    bias = bias.at[0, 2 * L + H:2 * L + 2 * H].set(bin_b)
    bias = bias.at[1, 0:H].set(bhn_f)
    bias = bias.at[1, H:2 * H].set(bhn_b)
    bias = bias.at[2, 0].set(params["b_s"].astype(f32)[0])
    bias = bias.at[2, 1].set(params["b_e"].astype(f32)[0])

    # --- head weights (256, 128): rows 0..127 act on the fwd-feature slab,
    #     rows 128..255 act on the (time-reversed-stored) bwd-feature slab. ---
    w_head = jnp.concatenate([params["w_s"], params["w_e"]], axis=0).T.astype(f32)  # (D, 2)
    whead = jnp.zeros((2 * L, L), f32)
    whead = whead.at[0:H, 0:2].set(w_head[0:H])                 # fwd hidden lanes
    whead = whead.at[L + H:L + 2 * H, 0:2].set(w_head[H:2 * H]) # bwd hidden lanes

    args = (x2d, wih, whh, whead, bias)

    out2d = pl.pallas_call(
        _make_gru_clf_kernel(T, B_pad, H),
        out_shape=jax.ShapeDtypeStruct((T * B_pad, L), f32),
        in_specs=[pl.BlockSpec(memory_space=pltpu.MemorySpace.VMEM) for _ in args],
        out_specs=pl.BlockSpec(memory_space=pltpu.MemorySpace.VMEM),
        scratch_shapes=[pltpu.VMEM((T * B_pad, GN), f32),   # gi
                        pltpu.VMEM((T * B_pad, L), f32),    # fwd features
                        pltpu.VMEM((T * B_pad, L), f32)],   # bwd features (time-ordered)
    )(*args)

    # (T*B_pad, 128) -> (B, T, 2)
    return jnp.transpose(out2d.reshape(T, B_pad, L)[:, :B, :2], (1, 0, 2))


def init_params(key, D):
    """Deterministic synthetic parameters matching nn.GRU / nn.Linear shapes."""
    H = D // 2
    ks = jax.random.split(key, 12)
    gru_bound = 1.0 / (H ** 0.5)
    lin_bound = 1.0 / (D ** 0.5)

    def u(k, shape, bound):
        return jax.random.uniform(k, shape, jnp.float32, -bound, bound)

    return {
        # GRU, forward direction (weight_ih_l0, weight_hh_l0, bias_ih_l0, bias_hh_l0)
        "wih_f": u(ks[0], (3 * H, D), gru_bound),
        "whh_f": u(ks[1], (3 * H, H), gru_bound),
        "bih_f": u(ks[2], (3 * H,), gru_bound),
        "bhh_f": u(ks[3], (3 * H,), gru_bound),
        # GRU, reverse direction (…_l0_reverse)
        "wih_b": u(ks[4], (3 * H, D), gru_bound),
        "whh_b": u(ks[5], (3 * H, H), gru_bound),
        "bih_b": u(ks[6], (3 * H,), gru_bound),
        "bhh_b": u(ks[7], (3 * H,), gru_bound),
        # clf_s / clf_e: Linear(D, 1), weight ~ N(0, 0.02^2)
        "w_s": 0.02 * jax.random.normal(ks[8], (1, D), jnp.float32),
        "b_s": u(ks[9], (1,), lin_bound),
        "w_e": 0.02 * jax.random.normal(ks[10], (1, D), jnp.float32),
        "b_e": u(ks[11], (1,), lin_bound),
    }


def gru_clf_reference(feat, params):
    """Pure-JAX reference of the PyTorch forward pass (for correctness check)."""
    B, T, D = feat.shape
    H = D // 2
    HI = jax.lax.Precision.HIGHEST

    def run_dir(xs, wih, whh, bih, bhh):
        def step(h, x_t):
            gi = jnp.dot(x_t, wih.T, precision=HI) + bih
            gh = jnp.dot(h, whh.T, precision=HI) + bhh
            r = jax.nn.sigmoid(gi[:, :H] + gh[:, :H])
            z = jax.nn.sigmoid(gi[:, H:2 * H] + gh[:, H:2 * H])
            n = jnp.tanh(gi[:, 2 * H:] + r * gh[:, 2 * H:])
            h_new = (1.0 - z) * n + z * h
            return h_new, h_new

        h0 = jnp.zeros((B, H), jnp.float32)
        _, hs = jax.lax.scan(step, h0, jnp.swapaxes(xs, 0, 1))
        return jnp.swapaxes(hs, 0, 1)                                        # (B, T, H)

    hf = run_dir(feat, params["wih_f"], params["whh_f"], params["bih_f"], params["bhh_f"])
    hb = run_dir(feat[:, ::-1], params["wih_b"], params["whh_b"],
                 params["bih_b"], params["bhh_b"])[:, ::-1]
    h = jnp.concatenate([hf, hb], axis=-1)
    h = jnp.where(h >= 0, h, 0.01 * h)
    start = jnp.dot(h, params["w_s"].T, precision=HI) + params["b_s"]
    end = jnp.dot(h, params["w_e"].T, precision=HI) + params["b_e"]
    return jnp.concatenate([start, end], axis=2)


if __name__ == "__main__":
    B, T, D = 2, 8, 32        # batch=2, seq=8, feat_dim=32 (hidden per direction = 16)
    key = jax.random.PRNGKey(0)
    kp, kx = jax.random.split(key)
    params = init_params(kp, D)
    feat = jax.random.normal(kx, (B, T, D), jnp.float32)

    out = jax.jit(gru_clf_forward)(feat, params)
    out = jax.block_until_ready(out)

    ref = gru_clf_reference(feat, params)
    assert out.shape == (B, T, 2), out.shape
    assert bool(jnp.allclose(out, ref, atol=1e-3, rtol=1e-3)), \
        float(jnp.max(jnp.abs(out - ref)))
    print("KERNEL_OK")
</pallas_src>

<mosaic_0001>
module attributes {stable_mosaic.version = 11 : i64} {
  func.func @kernel(%arg0: memref<64x64xf32, #tpu.memory_space<vmem>>, %arg1: memref<64x384xf32, #tpu.memory_space<vmem>>, %arg2: memref<128x384xf32, #tpu.memory_space<vmem>>, %arg3: memref<256x128xf32, #tpu.memory_space<vmem>>, %arg4: memref<3x384xf32, #tpu.memory_space<vmem>>, %arg5: memref<64x128xf32, #tpu.memory_space<vmem>>, %arg6: memref<64x384xf32, #tpu.memory_space<vmem>>, %arg7: memref<64x128xf32, #tpu.memory_space<vmem>>, %arg8: memref<64x128xf32, #tpu.memory_space<vmem>>) attributes {dimension_semantics = [], scalar_prefetch = 0 : i64, scratch_operands = 3 : i64, tpu.core_type = #tpu.core_type<tc>} {
    %c0 = arith.constant 0 : index
    %c0_0 = arith.constant 0 : index
    %0 = vector.load %arg0[%c0, %c0_0] : memref<64x64xf32, #tpu.memory_space<vmem>>, vector<64x64xf32>
    %c0_1 = arith.constant 0 : index
    %c0_2 = arith.constant 0 : index
    %1 = vector.load %arg1[%c0_1, %c0_2] : memref<64x384xf32, #tpu.memory_space<vmem>>, vector<64x384xf32>
    %cst = arith.constant dense<0.000000e+00> : vector<64x384xf32>
    %2 = tpu.matmul %0, %1, %cst {dimension_numbers = #tpu.dot_dimension_numbers<[1], [0], [0], [1], [0, 0, 1, 1], [], []>} : vector<64x64xf32>, vector<64x384xf32>, vector<64x384xf32> -> vector<64x384xf32>
    %c0_3 = arith.constant 0 : index
    %c0_4 = arith.constant 0 : index
    %3 = vector.load %arg4[%c0_3, %c0_4] : memref<3x384xf32, #tpu.memory_space<vmem>>, vector<1x384xf32>
    %4 = vector.broadcast %3 : vector<1x384xf32> to vector<64x384xf32>
    %5 = arith.addf %2, %4 : vector<64x384xf32>
    %c0_5 = arith.constant 0 : index
    %c0_6 = arith.constant 0 : index
    %6 = vector.load %arg6[%c0_5, %c0_6] : memref<64x384xf32, #tpu.memory_space<vmem>>, vector<64x384xf32>
    tpu.vector_store %arg6[%c0_5, %c0_6], %5 {strides = array<i32>} : memref<64x384xf32, #tpu.memory_space<vmem>>, vector<64x384xf32>,
    %c0_7 = arith.constant 0 : index
    %c0_8 = arith.constant 0 : index
    %7 = vector.load %arg2[%c0_7, %c0_8] : memref<128x384xf32, #tpu.memory_space<vmem>>, vector<128x384xf32>
    %c1 = arith.constant 1 : index
    %c0_9 = arith.constant 0 : index
    %8 = vector.load %arg4[%c1, %c0_9] : memref<3x384xf32, #tpu.memory_space<vmem>>, vector<1x128xf32>
    %9 = vector.shape_cast %8 : vector<1x128xf32> to vector<1x128xf32>
    %10 = vector.broadcast %9 : vector<1x128xf32> to vector<8x128xf32>
    %cst_10 = arith.constant 0.000000e+00 : f32
    %11 = vector.broadcast %cst_10 : f32 to vector<8x128xf32>
    %c0_i32 = arith.constant 0 : i32
    %c8_i32 = arith.constant 8 : i32
    %12 = arith.muli %c0_i32, %c8_i32 : i32
    %13 = tpu.assume_multiple %12, 8 : i32
    %c7_i32 = arith.constant 7 : i32
    %14 = arith.subi %c7_i32, %c0_i32 : i32
    %c8_i32_11 = arith.constant 8 : i32
    %15 = arith.muli %14, %c8_i32_11 : i32
    %16 = tpu.assume_multiple %15, 8 : i32
    %17 = arith.index_cast %13 : i32 to index
    %c0_12 = arith.constant 0 : index
    %18 = vector.load %arg6[%17, %c0_12] : memref<64x384xf32, #tpu.memory_space<vmem>>, vector<8x384xf32>
    %cst_13 = arith.constant dense<0.000000e+00> : vector<8x384xf32>
    %19 = tpu.matmul %11, %7, %cst_13 {dimension_numbers = #tpu.dot_dimension_numbers<[1], [0], [0], [1], [0, 0, 1, 1], [], []>} : vector<8x128xf32>, vector<128x384xf32>, vector<8x384xf32> -> vector<8x384xf32>
    %20 = vector.extract_strided_slice %18 {offsets = [0, 0], sizes = [8, 256], strides = [1, 1]} : vector<8x384xf32> to vector<8x256xf32>
    %21 = vector.extract_strided_slice %19 {offsets = [0, 0], sizes = [8, 256], strides = [1, 1]} : vector<8x384xf32> to vector<8x256xf32>
    %22 = arith.addf %20, %21 : vector<8x256xf32>
    %23 = arith.negf %22 : vector<8x256xf32>
    %24 = math.exp %23 : vector<8x256xf32>
    %cst_14 = arith.constant 1.000000e+00 : f32
    %25 = vector.broadcast %cst_14 : f32 to vector<8x256xf32>
    %26 = arith.addf %25, %24 : vector<8x256xf32>
    %27 = arith.divf %25, %26 : vector<8x256xf32>
    %28 = vector.extract_strided_slice %27 {offsets = [0, 0], sizes = [8, 128], strides = [1, 1]} : vector<8x256xf32> to vector<8x128xf32>
    %29 = vector.extract_strided_slice %27 {offsets = [0, 128], sizes = [8, 128], strides = [1, 1]} : vector<8x256xf32> to vector<8x128xf32>
    %30 = vector.extract_strided_slice %18 {offsets = [0, 256], sizes = [8, 128], strides = [1, 1]} : vector<8x384xf32> to vector<8x128xf32>
    %31 = vector.extract_strided_slice %19 {offsets = [0, 256], sizes = [8, 128], strides = [1, 1]} : vector<8x384xf32> to vector<8x128xf32>
    %32 = arith.addf %31, %10 : vector<8x128xf32>
    %33 = arith.mulf %28, %32 : vector<8x128xf32>
    %34 = arith.addf %30, %33 : vector<8x128xf32>
    %35 = math.tanh %34 : vector<8x128xf32>
    %cst_15 = arith.constant 1.000000e+00 : f32
    %36 = vector.broadcast %cst_15 : f32 to vector<8x128xf32>
    %37 = arith.subf %36, %29 : vector<8x128xf32>
    %38 = arith.mulf %37, %35 : vector<8x128xf32>
    %39 = arith.mulf %29, %11 : vector<8x128xf32>
    %40 = arith.addf %38, %39 : vector<8x128xf32>
    %41 = arith.index_cast %13 : i32 to index
    %c0_16 = arith.constant 0 : index
    %42 = vector.load %arg7[%41, %c0_16] : memref<64x128xf32, #tpu.memory_space<vmem>>, vector<8x128xf32>
    tpu.vector_store %arg7[%41, %c0_16], %40 {strides = array<i32>} : memref<64x128xf32, #tpu.memory_space<vmem>>, vector<8x128xf32>,
    %43 = arith.index_cast %16 : i32 to index
    %c0_17 = arith.constant 0 : index
    %44 = vector.load %arg8[%43, %c0_17] : memref<64x128xf32, #tpu.memory_space<vmem>>, vector<8x128xf32>
    tpu.vector_store %arg8[%43, %c0_17], %40 {strides = array<i32>} : memref<64x128xf32, #tpu.memory_space<vmem>>, vector<8x128xf32>,
    %c1_i32 = arith.constant 1 : i32
    %c8_i32_18 = arith.constant 8 : i32
    %45 = arith.muli %c1_i32, %c8_i32_18 : i32
    %46 = tpu.assume_multiple %45, 8 : i32
    %c7_i32_19 = arith.constant 7 : i32
    %47 = arith.subi %c7_i32_19, %c1_i32 : i32
    %c8_i32_20 = arith.constant 8 : i32
    %48 = arith.muli %47, %c8_i32_20 : i32
    %49 = tpu.assume_multiple %48, 8 : i32
    %50 = arith.index_cast %46 : i32 to index
    %c0_21 = arith.constant 0 : index
    %51 = vector.load %arg6[%50, %c0_21] : memref<64x384xf32, #tpu.memory_space<vmem>>, vector<8x384xf32>
    %cst_22 = arith.constant dense<0.000000e+00> : vector<8x384xf32>
    %52 = tpu.matmul %40, %7, %cst_22 {dimension_numbers = #tpu.dot_dimension_numbers<[1], [0], [0], [1], [0, 0, 1, 1], [], []>} : vector<8x128xf32>, vector<128x384xf32>, vector<8x384xf32> -> vector<8x384xf32>
    %53 = vector.extract_strided_slice %51 {offsets = [0, 0], sizes = [8, 256], strides = [1, 1]} : vector<8x384xf32> to vector<8x256xf32>
    %54 = vector.extract_strided_slice %52 {offsets = [0, 0], sizes = [8, 256], strides = [1, 1]} : vector<8x384xf32> to vector<8x256xf32>
    %55 = arith.addf %53, %54 : vector<8x256xf32>
    %56 = arith.negf %55 : vector<8x256xf32>
    %57 = math.exp %56 : vector<8x256xf32>
    %cst_23 = arith.constant 1.000000e+00 : f32
    %58 = vector.broadcast %cst_23 : f32 to vector<8x256xf32>
    %59 = arith.addf %58, %57 : vector<8x256xf32>
    %60 = arith.divf %58, %59 : vector<8x256xf32>
    %61 = vector.extract_strided_slice %60 {offsets = [0, 0], sizes = [8, 128], strides = [1, 1]} : vector<8x256xf32> to vector<8x128xf32>
    %62 = vector.extract_strided_slice %60 {offsets = [0, 128], sizes = [8, 128], strides = [1, 1]} : vector<8x256xf32> to vector<8x128xf32>
    %63 = vector.extract_strided_slice %51 {offsets = [0, 256], sizes = [8, 128], strides = [1, 1]} : vector<8x384xf32> to vector<8x128xf32>
    %64 = vector.extract_strided_slice %52 {offsets = [0, 256], sizes = [8, 128], strides = [1, 1]} : vector<8x384xf32> to vector<8x128xf32>
    %65 = arith.addf %64, %10 : vector<8x128xf32>
    %66 = arith.mulf %61, %65 : vector<8x128xf32>
    %67 = arith.addf %63, %66 : vector<8x128xf32>
    %68 = math.tanh %67 : vector<8x128xf32>
    %cst_24 = arith.constant 1.000000e+00 : f32
    %69 = vector.broadcast %cst_24 : f32 to vector<8x128xf32>
    %70 = arith.subf %69, %62 : vector<8x128xf32>
    %71 = arith.mulf %70, %68 : vector<8x128xf32>
    %72 = arith.mulf %62, %40 : vector<8x128xf32>
    %73 = arith.addf %71, %72 : vector<8x128xf32>
    %74 = arith.index_cast %46 : i32 to index
    %c0_25 = arith.constant 0 : index
    %75 = vector.load %arg7[%74, %c0_25] : memref<64x128xf32, #tpu.memory_space<vmem>>, vector<8x128xf32>
    tpu.vector_store %arg7[%74, %c0_25], %73 {strides = array<i32>} : memref<64x128xf32, #tpu.memory_space<vmem>>, vector<8x128xf32>,
    %76 = arith.index_cast %49 : i32 to index
    %c0_26 = arith.constant 0 : index
    %77 = vector.load %arg8[%76, %c0_26] : memref<64x128xf32, #tpu.memory_space<vmem>>, vector<8x128xf32>
    tpu.vector_store %arg8[%76, %c0_26], %73 {strides = array<i32>} : memref<64x128xf32, #tpu.memory_space<vmem>>, vector<8x128xf32>,
    %c2_i32 = arith.constant 2 : i32
    %c8_i32_27 = arith.constant 8 : i32
    %78 = arith.muli %c2_i32, %c8_i32_27 : i32
    %79 = tpu.assume_multiple %78, 8 : i32
    %c7_i32_28 = arith.constant 7 : i32
    %80 = arith.subi %c7_i32_28, %c2_i32 : i32
    %c8_i32_29 = arith.constant 8 : i32
    %81 = arith.muli %80, %c8_i32_29 : i32
    %82 = tpu.assume_multiple %81, 8 : i32
    %83 = arith.index_cast %79 : i32 to index
    %c0_30 = arith.constant 0 : index
    %84 = vector.load %arg6[%83, %c0_30] : memref<64x384xf32, #tpu.memory_space<vmem>>, vector<8x384xf32>
    %cst_31 = arith.constant dense<0.000000e+00> : vector<8x384xf32>
    %85 = tpu.matmul %73, %7, %cst_31 {dimension_numbers = #tpu.dot_dimension_numbers<[1], [0], [0], [1], [0, 0, 1, 1], [], []>} : vector<8x128xf32>, vector<128x384xf32>, vector<8x384xf32> -> vector<8x384xf32>
    %86 = vector.extract_strided_slice %84 {offsets = [0, 0], sizes = [8, 256], strides = [1, 1]} : vector<8x384xf32> to vector<8x256xf32>
    %87 = vector.extract_strided_slice %85 {offsets = [0, 0], sizes = [8, 256], strides = [1, 1]} : vector<8x384xf32> to vector<8x256xf32>
    %88 = arith.addf %86, %87 : vector<8x256xf32>
    %89 = arith.negf %88 : vector<8x256xf32>
    %90 = math.exp %89 : vector<8x256xf32>
    %cst_32 = arith.constant 1.000000e+00 : f32
    %91 = vector.broadcast %cst_32 : f32 to vector<8x256xf32>
    %92 = arith.addf %91, %90 : vector<8x256xf32>
    %93 = arith.divf %91, %92 : vector<8x256xf32>
    %94 = vector.extract_strided_slice %93 {offsets = [0, 0], sizes = [8, 128], strides = [1, 1]} : vector<8x256xf32> to vector<8x128xf32>
    %95 = vector.extract_strided_slice %93 {offsets = [0, 128], sizes = [8, 128], strides = [1, 1]} : vector<8x256xf32> to vector<8x128xf32>
    %96 = vector.extract_strided_slice %84 {offsets = [0, 256], sizes = [8, 128], strides = [1, 1]} : vector<8x384xf32> to vector<8x128xf32>
    %97 = vector.extract_strided_slice %85 {offsets = [0, 256], sizes = [8, 128], strides = [1, 1]} : vector<8x384xf32> to vector<8x128xf32>
    %98 = arith.addf %97, %10 : vector<8x128xf32>
    %99 = arith.mulf %94, %98 : vector<8x128xf32>
    %100 = arith.addf %96, %99 : vector<8x128xf32>
    %101 = math.tanh %100 : vector<8x128xf32>
    %cst_33 = arith.constant 1.000000e+00 : f32
    %102 = vector.broadcast %cst_33 : f32 to vector<8x128xf32>
    %103 = arith.subf %102, %95 : vector<8x128xf32>
    %104 = arith.mulf %103, %101 : vector<8x128xf32>
    %105 = arith.mulf %95, %73 : vector<8x128xf32>
    %106 = arith.addf %104, %105 : vector<8x128xf32>
    %107 = arith.index_cast %79 : i32 to index
    %c0_34 = arith.constant 0 : index
    %108 = vector.load %arg7[%107, %c0_34] : memref<64x128xf32, #tpu.memory_space<vmem>>, vector<8x128xf32>
    tpu.vector_store %arg7[%107, %c0_34], %106 {strides = array<i32>} : memref<64x128xf32, #tpu.memory_space<vmem>>, vector<8x128xf32>,
    %109 = arith.index_cast %82 : i32 to index
    %c0_35 = arith.constant 0 : index
    %110 = vector.load %arg8[%109, %c0_35] : memref<64x128xf32, #tpu.memory_space<vmem>>, vector<8x128xf32>
    tpu.vector_store %arg8[%109, %c0_35], %106 {strides = array<i32>} : memref<64x128xf32, #tpu.memory_space<vmem>>, vector<8x128xf32>,
    %c3_i32 = arith.constant 3 : i32
    %c8_i32_36 = arith.constant 8 : i32
    %111 = arith.muli %c3_i32, %c8_i32_36 : i32
    %112 = tpu.assume_multiple %111, 8 : i32
    %c7_i32_37 = arith.constant 7 : i32
    %113 = arith.subi %c7_i32_37, %c3_i32 : i32
    %c8_i32_38 = arith.constant 8 : i32
    %114 = arith.muli %113, %c8_i32_38 : i32
    %115 = tpu.assume_multiple %114, 8 : i32
    %116 = arith.index_cast %112 : i32 to index
    %c0_39 = arith.constant 0 : index
    %117 = vector.load %arg6[%116, %c0_39] : memref<64x384xf32, #tpu.memory_space<vmem>>, vector<8x384xf32>
    %cst_40 = arith.constant dense<0.000000e+00> : vector<8x384xf32>
    %118 = tpu.matmul %106, %7, %cst_40 {dimension_numbers = #tpu.dot_dimension_numbers<[1], [0], [0], [1], [0, 0, 1, 1], [], []>} : vector<8x128xf32>, vector<128x384xf32>, vector<8x384xf32> -> vector<8x384xf32>
    %119 = vector.extract_strided_slice %117 {offsets = [0, 0], sizes = [8, 256], strides = [1, 1]} : vector<8x384xf32> to vector<8x256xf32>
    %120 = vector.extract_strided_slice %118 {offsets = [0, 0], sizes = [8, 256], strides = [1, 1]} : vector<8x384xf32> to vector<8x256xf32>
    %121 = arith.addf %119, %120 : vector<8x256xf32>
    %122 = arith.negf %121 : vector<8x256xf32>
    %123 = math.exp %122 : vector<8x256xf32>
    %cst_41 = arith.constant 1.000000e+00 : f32
    %124 = vector.broadcast %cst_41 : f32 to vector<8x256xf32>
    %125 = arith.addf %124, %123 : vector<8x256xf32>
    %126 = arith.divf %124, %125 : vector<8x256xf32>
    %127 = vector.extract_strided_slice %126 {offsets = [0, 0], sizes = [8, 128], strides = [1, 1]} : vector<8x256xf32> to vector<8x128xf32>
    %128 = vector.extract_strided_slice %126 {offsets = [0, 128], sizes = [8, 128], strides = [1, 1]} : vector<8x256xf32> to vector<8x128xf32>
    %129 = vector.extract_strided_slice %117 {offsets = [0, 256], sizes = [8, 128], strides = [1, 1]} : vector<8x384xf32> to vector<8x128xf32>
    %130 = vector.extract_strided_slice %118 {offsets = [0, 256], sizes = [8, 128], strides = [1, 1]} : vector<8x384xf32> to vector<8x128xf32>
    %131 = arith.addf %130, %10 : vector<8x128xf32>
    %132 = arith.mulf %127, %131 : vector<8x128xf32>
    %133 = arith.addf %129, %132 : vector<8x128xf32>
    %134 = math.tanh %133 : vector<8x128xf32>
    %cst_42 = arith.constant 1.000000e+00 : f32
    %135 = vector.broadcast %cst_42 : f32 to vector<8x128xf32>
    %136 = arith.subf %135, %128 : vector<8x128xf32>
    %137 = arith.mulf %136, %134 : vector<8x128xf32>
    %138 = arith.mulf %128, %106 : vector<8x128xf32>
    %139 = arith.addf %137, %138 : vector<8x128xf32>
    %140 = arith.index_cast %112 : i32 to index
    %c0_43 = arith.constant 0 : index
    %141 = vector.load %arg7[%140, %c0_43] : memref<64x128xf32, #tpu.memory_space<vmem>>, vector<8x128xf32>
    tpu.vector_store %arg7[%140, %c0_43], %139 {strides = array<i32>} : memref<64x128xf32, #tpu.memory_space<vmem>>, vector<8x128xf32>,
    %142 = arith.index_cast %115 : i32 to index
    %c0_44 = arith.constant 0 : index
    %143 = vector.load %arg8[%142, %c0_44] : memref<64x128xf32, #tpu.memory_space<vmem>>, vector<8x128xf32>
    tpu.vector_store %arg8[%142, %c0_44], %139 {strides = array<i32>} : memref<64x128xf32, #tpu.memory_space<vmem>>, vector<8x128xf32>,
    %c4_i32 = arith.constant 4 : i32
    %c8_i32_45 = arith.constant 8 : i32
    %144 = arith.muli %c4_i32, %c8_i32_45 : i32
    %145 = tpu.assume_multiple %144, 8 : i32
    %c7_i32_46 = arith.constant 7 : i32
    %146 = arith.subi %c7_i32_46, %c4_i32 : i32
    %c8_i32_47 = arith.constant 8 : i32
    %147 = arith.muli %146, %c8_i32_47 : i32
    %148 = tpu.assume_multiple %147, 8 : i32
    %149 = arith.index_cast %145 : i32 to index
    %c0_48 = arith.constant 0 : index
    %150 = vector.load %arg6[%149, %c0_48] : memref<64x384xf32, #tpu.memory_space<vmem>>, vector<8x384xf32>
    %cst_49 = arith.constant dense<0.000000e+00> : vector<8x384xf32>
    %151 = tpu.matmul %139, %7, %cst_49 {dimension_numbers = #tpu.dot_dimension_numbers<[1], [0], [0], [1], [0, 0, 1, 1], [], []>} : vector<8x128xf32>, vector<128x384xf32>, vector<8x384xf32> -> vector<8x384xf32>
    %152 = vector.extract_strided_slice %150 {offsets = [0, 0], sizes = [8, 256], strides = [1, 1]} : vector<8x384xf32> to vector<8x256xf32>
    %153 = vector.extract_strided_slice %151 {offsets = [0, 0], sizes = [8, 256], strides = [1, 1]} : vector<8x384xf32> to vector<8x256xf32>
    %154 = arith.addf %152, %153 : vector<8x256xf32>
    %155 = arith.negf %154 : vector<8x256xf32>
    %156 = math.exp %155 : vector<8x256xf32>
    %cst_50 = arith.constant 1.000000e+00 : f32
    %157 = vector.broadcast %cst_50 : f32 to vector<8x256xf32>
    %158 = arith.addf %157, %156 : vector<8x256xf32>
    %159 = arith.divf %157, %158 : vector<8x256xf32>
    %160 = vector.extract_strided_slice %159 {offsets = [0, 0], sizes = [8, 128], strides = [1, 1]} : vector<8x256xf32> to vector<8x128xf32>
    %161 = vector.extract_strided_slice %159 {offsets = [0, 128], sizes = [8, 128], strides = [1, 1]} : vector<8x256xf32> to vector<8x128xf32>
    %162 = vector.extract_strided_slice %150 {offsets = [0, 256], sizes = [8, 128], strides = [1, 1]} : vector<8x384xf32> to vector<8x128xf32>
    %163 = vector.extract_strided_slice %151 {offsets = [0, 256], sizes = [8, 128], strides = [1, 1]} : vector<8x384xf32> to vector<8x128xf32>
    %164 = arith.addf %163, %10 : vector<8x128xf32>
    %165 = arith.mulf %160, %164 : vector<8x128xf32>
    %166 = arith.addf %162, %165 : vector<8x128xf32>
    %167 = math.tanh %166 : vector<8x128xf32>
    %cst_51 = arith.constant 1.000000e+00 : f32
    %168 = vector.broadcast %cst_51 : f32 to vector<8x128xf32>
    %169 = arith.subf %168, %161 : vector<8x128xf32>
    %170 = arith.mulf %169, %167 : vector<8x128xf32>
    %171 = arith.mulf %161, %139 : vector<8x128xf32>
    %172 = arith.addf %170, %171 : vector<8x128xf32>
    %173 = arith.index_cast %145 : i32 to index
    %c0_52 = arith.constant 0 : index
    %174 = vector.load %arg7[%173, %c0_52] : memref<64x128xf32, #tpu.memory_space<vmem>>, vector<8x128xf32>
    tpu.vector_store %arg7[%173, %c0_52], %172 {strides = array<i32>} : memref<64x128xf32, #tpu.memory_space<vmem>>, vector<8x128xf32>,
    %175 = arith.index_cast %148 : i32 to index
    %c0_53 = arith.constant 0 : index
    %176 = vector.load %arg8[%175, %c0_53] : memref<64x128xf32, #tpu.memory_space<vmem>>, vector<8x128xf32>
    tpu.vector_store %arg8[%175, %c0_53], %172 {strides = array<i32>} : memref<64x128xf32, #tpu.memory_space<vmem>>, vector<8x128xf32>,
    %c5_i32 = arith.constant 5 : i32
    %c8_i32_54 = arith.constant 8 : i32
    %177 = arith.muli %c5_i32, %c8_i32_54 : i32
    %178 = tpu.assume_multiple %177, 8 : i32
    %c7_i32_55 = arith.constant 7 : i32
    %179 = arith.subi %c7_i32_55, %c5_i32 : i32
    %c8_i32_56 = arith.constant 8 : i32
    %180 = arith.muli %179, %c8_i32_56 : i32
    %181 = tpu.assume_multiple %180, 8 : i32
    %182 = arith.index_cast %178 : i32 to index
    %c0_57 = arith.constant 0 : index
    %183 = vector.load %arg6[%182, %c0_57] : memref<64x384xf32, #tpu.memory_space<vmem>>, vector<8x384xf32>
    %cst_58 = arith.constant dense<0.000000e+00> : vector<8x384xf32>
    %184 = tpu.matmul %172, %7, %cst_58 {dimension_numbers = #tpu.dot_dimension_numbers<[1], [0], [0], [1], [0, 0, 1, 1], [], []>} : vector<8x128xf32>, vector<128x384xf32>, vector<8x384xf32> -> vector<8x384xf32>
    %185 = vector.extract_strided_slice %183 {offsets = [0, 0], sizes = [8, 256], strides = [1, 1]} : vector<8x384xf32> to vector<8x256xf32>
    %186 = vector.extract_strided_slice %184 {offsets = [0, 0], sizes = [8, 256], strides = [1, 1]} : vector<8x384xf32> to vector<8x256xf32>
    %187 = arith.addf %185, %186 : vector<8x256xf32>
    %188 = arith.negf %187 : vector<8x256xf32>
    %189 = math.exp %188 : vector<8x256xf32>
    %cst_59 = arith.constant 1.000000e+00 : f32
    %190 = vector.broadcast %cst_59 : f32 to vector<8x256xf32>
    %191 = arith.addf %190, %189 : vector<8x256xf32>
    %192 = arith.divf %190, %191 : vector<8x256xf32>
    %193 = vector.extract_strided_slice %192 {offsets = [0, 0], sizes = [8, 128], strides = [1, 1]} : vector<8x256xf32> to vector<8x128xf32>
    %194 = vector.extract_strided_slice %192 {offsets = [0, 128], sizes = [8, 128], strides = [1, 1]} : vector<8x256xf32> to vector<8x128xf32>
    %195 = vector.extract_strided_slice %183 {offsets = [0, 256], sizes = [8, 128], strides = [1, 1]} : vector<8x384xf32> to vector<8x128xf32>
    %196 = vector.extract_strided_slice %184 {offsets = [0, 256], sizes = [8, 128], strides = [1, 1]} : vector<8x384xf32> to vector<8x128xf32>
    %197 = arith.addf %196, %10 : vector<8x128xf32>
    %198 = arith.mulf %193, %197 : vector<8x128xf32>
    %199 = arith.addf %195, %198 : vector<8x128xf32>
    %200 = math.tanh %199 : vector<8x128xf32>
    %cst_60 = arith.constant 1.000000e+00 : f32
    %201 = vector.broadcast %cst_60 : f32 to vector<8x128xf32>
    %202 = arith.subf %201, %194 : vector<8x128xf32>
    %203 = arith.mulf %202, %200 : vector<8x128xf32>
    %204 = arith.mulf %194, %172 : vector<8x128xf32>
    %205 = arith.addf %203, %204 : vector<8x128xf32>
    %206 = arith.index_cast %178 : i32 to index
    %c0_61 = arith.constant 0 : index
    %207 = vector.load %arg7[%206, %c0_61] : memref<64x128xf32, #tpu.memory_space<vmem>>, vector<8x128xf32>
    tpu.vector_store %arg7[%206, %c0_61], %205 {strides = array<i32>} : memref<64x128xf32, #tpu.memory_space<vmem>>, vector<8x128xf32>,
    %208 = arith.index_cast %181 : i32 to index
    %c0_62 = arith.constant 0 : index
    %209 = vector.load %arg8[%208, %c0_62] : memref<64x128xf32, #tpu.memory_space<vmem>>, vector<8x128xf32>
    tpu.vector_store %arg8[%208, %c0_62], %205 {strides = array<i32>} : memref<64x128xf32, #tpu.memory_space<vmem>>, vector<8x128xf32>,
    %c6_i32 = arith.constant 6 : i32
    %c8_i32_63 = arith.constant 8 : i32
    %210 = arith.muli %c6_i32, %c8_i32_63 : i32
    %211 = tpu.assume_multiple %210, 8 : i32
    %c7_i32_64 = arith.constant 7 : i32
    %212 = arith.subi %c7_i32_64, %c6_i32 : i32
    %c8_i32_65 = arith.constant 8 : i32
    %213 = arith.muli %212, %c8_i32_65 : i32
    %214 = tpu.assume_multiple %213, 8 : i32
    %215 = arith.index_cast %211 : i32 to index
    %c0_66 = arith.constant 0 : index
    %216 = vector.load %arg6[%215, %c0_66] : memref<64x384xf32, #tpu.memory_space<vmem>>, vector<8x384xf32>
    %cst_67 = arith.constant dense<0.000000e+00> : vector<8x384xf32>
    %217 = tpu.matmul %205, %7, %cst_67 {dimension_numbers = #tpu.dot_dimension_numbers<[1], [0], [0], [1], [0, 0, 1, 1], [], []>} : vector<8x128xf32>, vector<128x384xf32>, vector<8x384xf32> -> vector<8x384xf32>
    %218 = vector.extract_strided_slice %216 {offsets = [0, 0], sizes = [8, 256], strides = [1, 1]} : vector<8x384xf32> to vector<8x256xf32>
    %219 = vector.extract_strided_slice %217 {offsets = [0, 0], sizes = [8, 256], strides = [1, 1]} : vector<8x384xf32> to vector<8x256xf32>
    %220 = arith.addf %218, %219 : vector<8x256xf32>
    %221 = arith.negf %220 : vector<8x256xf32>
    %222 = math.exp %221 : vector<8x256xf32>
    %cst_68 = arith.constant 1.000000e+00 : f32
    %223 = vector.broadcast %cst_68 : f32 to vector<8x256xf32>
    %224 = arith.addf %223, %222 : vector<8x256xf32>
    %225 = arith.divf %223, %224 : vector<8x256xf32>
    %226 = vector.extract_strided_slice %225 {offsets = [0, 0], sizes = [8, 128], strides = [1, 1]} : vector<8x256xf32> to vector<8x128xf32>
    %227 = vector.extract_strided_slice %225 {offsets = [0, 128], sizes = [8, 128], strides = [1, 1]} : vector<8x256xf32> to vector<8x128xf32>
    %228 = vector.extract_strided_slice %216 {offsets = [0, 256], sizes = [8, 128], strides = [1, 1]} : vector<8x384xf32> to vector<8x128xf32>
    %229 = vector.extract_strided_slice %217 {offsets = [0, 256], sizes = [8, 128], strides = [1, 1]} : vector<8x384xf32> to vector<8x128xf32>
    %230 = arith.addf %229, %10 : vector<8x128xf32>
    %231 = arith.mulf %226, %230 : vector<8x128xf32>
    %232 = arith.addf %228, %231 : vector<8x128xf32>
    %233 = math.tanh %232 : vector<8x128xf32>
    %cst_69 = arith.constant 1.000000e+00 : f32
    %234 = vector.broadcast %cst_69 : f32 to vector<8x128xf32>
    %235 = arith.subf %234, %227 : vector<8x128xf32>
    %236 = arith.mulf %235, %233 : vector<8x128xf32>
    %237 = arith.mulf %227, %205 : vector<8x128xf32>
    %238 = arith.addf %236, %237 : vector<8x128xf32>
    %239 = arith.index_cast %211 : i32 to index
    %c0_70 = arith.constant 0 : index
    %240 = vector.load %arg7[%239, %c0_70] : memref<64x128xf32, #tpu.memory_space<vmem>>, vector<8x128xf32>
    tpu.vector_store %arg7[%239, %c0_70], %238 {strides = array<i32>} : memref<64x128xf32, #tpu.memory_space<vmem>>, vector<8x128xf32>,
    %241 = arith.index_cast %214 : i32 to index
    %c0_71 = arith.constant 0 : index
    %242 = vector.load %arg8[%241, %c0_71] : memref<64x128xf32, #tpu.memory_space<vmem>>, vector<8x128xf32>
    tpu.vector_store %arg8[%241, %c0_71], %238 {strides = array<i32>} : memref<64x128xf32, #tpu.memory_space<vmem>>, vector<8x128xf32>,
    %c7_i32_72 = arith.constant 7 : i32
    %c8_i32_73 = arith.constant 8 : i32
    %243 = arith.muli %c7_i32_72, %c8_i32_73 : i32
    %244 = tpu.assume_multiple %243, 8 : i32
    %c7_i32_74 = arith.constant 7 : i32
    %245 = arith.subi %c7_i32_74, %c7_i32_72 : i32
    %c8_i32_75 = arith.constant 8 : i32
    %246 = arith.muli %245, %c8_i32_75 : i32
    %247 = tpu.assume_multiple %246, 8 : i32
    %248 = arith.index_cast %244 : i32 to index
    %c0_76 = arith.constant 0 : index
    %249 = vector.load %arg6[%248, %c0_76] : memref<64x384xf32, #tpu.memory_space<vmem>>, vector<8x384xf32>
    %cst_77 = arith.constant dense<0.000000e+00> : vector<8x384xf32>
    %250 = tpu.matmul %238, %7, %cst_77 {dimension_numbers = #tpu.dot_dimension_numbers<[1], [0], [0], [1], [0, 0, 1, 1], [], []>} : vector<8x128xf32>, vector<128x384xf32>, vector<8x384xf32> -> vector<8x384xf32>
    %251 = vector.extract_strided_slice %249 {offsets = [0, 0], sizes = [8, 256], strides = [1, 1]} : vector<8x384xf32> to vector<8x256xf32>
    %252 = vector.extract_strided_slice %250 {offsets = [0, 0], sizes = [8, 256], strides = [1, 1]} : vector<8x384xf32> to vector<8x256xf32>
    %253 = arith.addf %251, %252 : vector<8x256xf32>
    %254 = arith.negf %253 : vector<8x256xf32>
    %255 = math.exp %254 : vector<8x256xf32>
    %cst_78 = arith.constant 1.000000e+00 : f32
    %256 = vector.broadcast %cst_78 : f32 to vector<8x256xf32>
    %257 = arith.addf %256, %255 : vector<8x256xf32>
    %258 = arith.divf %256, %257 : vector<8x256xf32>
    %259 = vector.extract_strided_slice %258 {offsets = [0, 0], sizes = [8, 128], strides = [1, 1]} : vector<8x256xf32> to vector<8x128xf32>
    %260 = vector.extract_strided_slice %258 {offsets = [0, 128], sizes = [8, 128], strides = [1, 1]} : vector<8x256xf32> to vector<8x128xf32>
    %261 = vector.extract_strided_slice %249 {offsets = [0, 256], sizes = [8, 128], strides = [1, 1]} : vector<8x384xf32> to vector<8x128xf32>
    %262 = vector.extract_strided_slice %250 {offsets = [0, 256], sizes = [8, 128], strides = [1, 1]} : vector<8x384xf32> to vector<8x128xf32>
    %263 = arith.addf %262, %10 : vector<8x128xf32>
    %264 = arith.mulf %259, %263 : vector<8x128xf32>
    %265 = arith.addf %261, %264 : vector<8x128xf32>
    %266 = math.tanh %265 : vector<8x128xf32>
    %cst_79 = arith.constant 1.000000e+00 : f32
    %267 = vector.broadcast %cst_79 : f32 to vector<8x128xf32>
    %268 = arith.subf %267, %260 : vector<8x128xf32>
    %269 = arith.mulf %268, %266 : vector<8x128xf32>
    %270 = arith.mulf %260, %238 : vector<8x128xf32>
    %271 = arith.addf %269, %270 : vector<8x128xf32>
    %272 = arith.index_cast %244 : i32 to index
    %c0_80 = arith.constant 0 : index
    %273 = vector.load %arg7[%272, %c0_80] : memref<64x128xf32, #tpu.memory_space<vmem>>, vector<8x128xf32>
    tpu.vector_store %arg7[%272, %c0_80], %271 {strides = array<i32>} : memref<64x128xf32, #tpu.memory_space<vmem>>, vector<8x128xf32>,
    %274 = arith.index_cast %247 : i32 to index
    %c0_81 = arith.constant 0 : index
    %275 = vector.load %arg8[%274, %c0_81] : memref<64x128xf32, #tpu.memory_space<vmem>>, vector<8x128xf32>
    tpu.vector_store %arg8[%274, %c0_81], %271 {strides = array<i32>} : memref<64x128xf32, #tpu.memory_space<vmem>>, vector<8x128xf32>,
    %c8_i32_82 = arith.constant 8 : i32
    %c0_83 = arith.constant 0 : index
    %c0_84 = arith.constant 0 : index
    %276 = vector.load %arg7[%c0_83, %c0_84] : memref<64x128xf32, #tpu.memory_space<vmem>>, vector<64x128xf32>
    %cst_85 = arith.constant 0.000000e+00 : f32
    %277 = vector.broadcast %cst_85 : f32 to vector<64x128xf32>
    %278 = arith.cmpf oge, %276, %277 : vector<64x128xf32>
    %cst_86 = arith.constant 0.00999999977 : f32
    %279 = vector.broadcast %cst_86 : f32 to vector<64x128xf32>
    %280 = arith.mulf %279, %276 : vector<64x128xf32>
    %281 = arith.select %278, %276, %280 : vector<64x128xi1>, vector<64x128xf32>
    %c0_87 = arith.constant 0 : index
    %c0_88 = arith.constant 0 : index
    %282 = vector.load %arg8[%c0_87, %c0_88] : memref<64x128xf32, #tpu.memory_space<vmem>>, vector<64x128xf32>
    %cst_89 = arith.constant 0.000000e+00 : f32
    %283 = vector.broadcast %cst_89 : f32 to vector<64x128xf32>
    %284 = arith.cmpf oge, %282, %283 : vector<64x128xf32>
    %cst_90 = arith.constant 0.00999999977 : f32
    %285 = vector.broadcast %cst_90 : f32 to vector<64x128xf32>
    %286 = arith.mulf %285, %282 : vector<64x128xf32>
    %287 = arith.select %284, %282, %286 : vector<64x128xi1>, vector<64x128xf32>
    %c0_91 = arith.constant 0 : index
    %c0_92 = arith.constant 0 : index
    %288 = vector.load %arg3[%c0_91, %c0_92] : memref<256x128xf32, #tpu.memory_space<vmem>>, vector<128x128xf32>
    %cst_93 = arith.constant dense<0.000000e+00> : vector<64x128xf32>
    %289 = tpu.matmul %281, %288, %cst_93 {dimension_numbers = #tpu.dot_dimension_numbers<[1], [0], [0], [1], [0, 0, 1, 1], [], []>} : vector<64x128xf32>, vector<128x128xf32>, vector<64x128xf32> -> vector<64x128xf32>
    %c128 = arith.constant 128 : index
    %c0_94 = arith.constant 0 : index
    %290 = vector.load %arg3[%c128, %c0_94] : memref<256x128xf32, #tpu.memory_space<vmem>>, vector<128x128xf32>
    %cst_95 = arith.constant dense<0.000000e+00> : vector<64x128xf32>
    %291 = tpu.matmul %287, %290, %cst_95 {dimension_numbers = #tpu.dot_dimension_numbers<[1], [0], [0], [1], [0, 0, 1, 1], [], []>} : vector<64x128xf32>, vector<128x128xf32>, vector<64x128xf32> -> vector<64x128xf32>
    %292 = arith.addf %289, %291 : vector<64x128xf32>
    %c2 = arith.constant 2 : index
    %c0_96 = arith.constant 0 : index
    %293 = vector.load %arg4[%c2, %c0_96] : memref<3x384xf32, #tpu.memory_space<vmem>>, vector<1x128xf32>
    %294 = vector.broadcast %293 : vector<1x128xf32> to vector<64x128xf32>
    %295 = arith.addf %292, %294 : vector<64x128xf32>
    %c0_97 = arith.constant 0 : index
    %c0_98 = arith.constant 0 : index
    %296 = vector.load %arg5[%c0_97, %c0_98] : memref<64x128xf32, #tpu.memory_space<vmem>>, vector<64x128xf32>
    tpu.vector_store %arg5[%c0_97, %c0_98], %295 {strides = array<i32>} : memref<64x128xf32, #tpu.memory_space<vmem>>, vector<64x128xf32>,
    return
  }
}

</mosaic_0001>

<llo_original>
// kernel: gru_clf_forward.1
$region0: #{gru_clf_forward.1}
  #allocation0 [shape = 'u32[]', space=smem, size = 0x4, offset = 0x4, fixed_abs, tag = 'smem constant byte address 0x4 - core index']
  #allocation1 [shape = 'u32[144,128]{1,0:T(1,128)}', space=vmem, size = 0x12000, scoped, tag = 'internal scratch']
  #allocation2 [shape = 'f32[64,384]{1,0:T(8,128)}', space=vmem, size = 0x18000, scoped, tag = 'scratch operand']
  #allocation3 [shape = 'f32[64,128]{1,0:T(8,128)}', space=vmem, size = 0x8000, scoped, tag = 'scratch operand']
  #allocation4 [shape = 'f32[64,128]{1,0:T(8,128)}', space=vmem, size = 0x8000, scoped, tag = 'scratch operand']
  %s0 = inlined_call_operand.vmem [shape: f32[64,64], index: 0, kind: input, shape index: {}]
  %s1 = inlined_call_operand.vmem [shape: f32[64,384], index: 1, kind: input, shape index: {}]
  %s2 = inlined_call_operand.vmem [shape: f32[128,384], index: 2, kind: input, shape index: {}]
  %s3 = inlined_call_operand.vmem [shape: f32[256,128], index: 3, kind: input, shape index: {}]
  %s4 = inlined_call_operand.vmem [shape: f32[3,384], index: 4, kind: input, shape index: {}]
  %s5 = inlined_call_operand.vmem [shape: f32[64,128], index: 5, kind: output, shape index: {}]
  %s6 = sld [smem:[#allocation0]]
  $region30: #{gru_clf_forward.1} parent=0
    _
  %s8 = ssub.s32 1, %s6
  %s9 = scalar_select 0, %s8, %s6
  // Predicated region
  $region2: #{gru_clf_forward.1} parent=0 // pred_check
    _
  $region3: #{gru_clf_forward.1} parent=0 // pred_check_branch
    %11 = sbr.rel (0) target = $region5
  $region4: #{gru_clf_forward.1} parent=0 // pred_region
    _
  $region5: #{gru_clf_forward.1} parent=0 // pred_fallthru
    _
  // Predicated region
  $region6: #{gru_clf_forward.1} parent=0 // pred_check
    _
  $region7: #{gru_clf_forward.1} parent=0 // pred_check_branch
    %13 = sbr.rel (0) target = $region9
  $region8: #{gru_clf_forward.1} parent=0 // pred_region
    _
  $region9: #{gru_clf_forward.1} parent=0 // pred_fallthru
    _
  // Predicated region
  $region10: #{gru_clf_forward.1} parent=0 // pred_check
    _
  $region11: #{gru_clf_forward.1} parent=0 // pred_check_branch
    %15 = sbr.rel (0) target = $region13
  $region12: #{gru_clf_forward.1} parent=0 // pred_region
    _
  $region13: #{gru_clf_forward.1} parent=0 // pred_fallthru
    _
  // Predicated region
  $region14: #{gru_clf_forward.1} parent=0 // pred_check
    _
  $region15: #{gru_clf_forward.1} parent=0 // pred_check_branch
    %17 = sbr.rel (0) target = $region17
  $region16: #{gru_clf_forward.1} parent=0 // pred_region
    _
  $region17: #{gru_clf_forward.1} parent=0 // pred_fallthru
    _
  // Predicated region
  $region18: #{gru_clf_forward.1} parent=0 // pred_check
    _
  $region19: #{gru_clf_forward.1} parent=0 // pred_check_branch
    %19 = sbr.rel (0) target = $region21
  $region20: #{gru_clf_forward.1} parent=0 // pred_region
    _
  $region21: #{gru_clf_forward.1} parent=0 // pred_fallthru
    _
  %v20 = vld [vmem:[%s0] sm:$0xff]
  %v21 = vld [vmem:[%s0 + $0x8] sm:$0xff]
  %v22 = vld [vmem:[%s0 + $0x10] sm:$0xff]
  %v23 = vld [vmem:[%s0 + $0x18] sm:$0xff]
  %v24 = vld [vmem:[%s0 + $0x20] sm:$0xff]
  %v25 = vld [vmem:[%s0 + $0x28] sm:$0xff]
  %v26 = vld [vmem:[%s0 + $0x30] sm:$0xff]
  %v27 = vld [vmem:[%s0 + $0x38] sm:$0xff]
  %v28 = vld [vmem:[%s1] sm:$0xff]
  %v29 = vld [vmem:[%s1 + $0x8] sm:$0xff]
  %v30 = vld [vmem:[%s1 + $0x10] sm:$0xff]
  %v31 = vld [vmem:[%s1 + $0x18] sm:$0xff]
  %v32 = vld [vmem:[%s1 + $0x20] sm:$0xff]
  %v33 = vld [vmem:[%s1 + $0x28] sm:$0xff]
  %v34 = vld [vmem:[%s1 + $0x30] sm:$0xff]
  %v35 = vld [vmem:[%s1 + $0x38] sm:$0xff]
  %v36 = vld [vmem:[%s1 + $0x40] sm:$0xff]
  %v37 = vld [vmem:[%s1 + $0x48] sm:$0xff]
  %v38 = vld [vmem:[%s1 + $0x50] sm:$0xff]
  %v39 = vld [vmem:[%s1 + $0x58] sm:$0xff]
  %v40 = vld [vmem:[%s1 + $0x60] sm:$0xff]
  %v41 = vld [vmem:[%s1 + $0x68] sm:$0xff]
  %v42 = vld [vmem:[%s1 + $0x70] sm:$0xff]
  %v43 = vld [vmem:[%s1 + $0x78] sm:$0xff]
  %v44 = vld [vmem:[%s1 + $0x80] sm:$0xff]
  %v45 = vld [vmem:[%s1 + $0x88] sm:$0xff]
  %v46 = vld [vmem:[%s1 + $0x90] sm:$0xff]
  %v47 = vld [vmem:[%s1 + $0x98] sm:$0xff]
  %v48 = vld [vmem:[%s1 + $0xa0] sm:$0xff]
  %v49 = vld [vmem:[%s1 + $0xa8] sm:$0xff]
  %v50 = vld [vmem:[%s1 + $0xb0] sm:$0xff]
  %v51 = vld [vmem:[%s1 + $0xb8] sm:$0xff]
  %v52 = vld [vmem:[%s4] ss:$4 sm:$0x7]
  %v54 = vlaneseq
  %v55 = vshrl.u32 %v54, 7
  %v56 = vsub.s32 0, %v55
  %v57 = vrot.slane %v52, %v56
  %v58 = vlaneseq
  %v59 = vshrl.u32 %v58, 7
  %v60 = vsub.s32 1, %v59
  %v61 = vrot.slane %v52, %v60
  %v62 = vlaneseq
  %v63 = vshrl.u32 %v62, 7
  %v64 = vsub.s32 2, %v63
  %v65 = vrot.slane %v52, %v64
  %vm69 = vcmask 523264
  %v71 = vsel %vm69, %v20, 0
  %v74 = vsel %vm69, %v21, 0
  %v77 = vsel %vm69, %v22, 0
  %v80 = vsel %vm69, %v23, 0
  %v83 = vsel %vm69, %v24, 0
  %v86 = vsel %vm69, %v25, 0
  %v89 = vsel %vm69, %v26, 0
  %v92 = vsel %vm69, %v27, 0
  %94 = vmatprep.subr.mxu0 0.0
  %95 = vmatpush1.msra.mxu0 0.0
  %96 = vmatprep.subr.mxu0 0.0
  %97 = vmatpush1.msra.mxu0 0.0
  %98 = vmatprep.subr.mxu0 0.0
  %99 = vmatpush1.msra.mxu0 0.0
  %100 = vmatprep.subr.mxu0 0.0
  %101 = vmatpush1.msra.mxu0 0.0
  %102 = vmatprep.subr.mxu0 0.0
  %103 = vmatpush1.msra.mxu0 0.0
  %104 = vmatprep.subr.mxu0 0.0
  %105 = vmatpush1.msra.mxu0 0.0
  %106 = vmatprep.subr.mxu0 0.0
  %107 = vmatpush1.msra.mxu0 0.0
  %108 = vmatprep.subr.mxu0 0.0
  %109 = vmatpush1.msra.mxu0 0.0
  %110 = vmatprep.subr.mxu0 %v50
  %111 = vmatpush1.msra.mxu0 %v49
  %112 = vmatprep.subr.mxu0 %v47
  %113 = vmatpush1.msra.mxu0 %v46
  %114 = vmatprep.subr.mxu0 %v44
  %115 = vmatpush1.msra.mxu0 %v43
  %116 = vmatprep.subr.mxu0 %v41
  %117 = vmatpush1.msra.mxu0 %v40
  %118 = vmatprep.subr.mxu0 %v38
  %119 = vmatpush1.msra.mxu0 %v37
  %120 = vmatprep.subr.mxu0 %v35
  %121 = vmatpush1.msra.mxu0 %v34
  %122 = vmatprep.subr.mxu0 %v32
  %123 = vmatpush1.msra.mxu0 %v31
  %124 = vmatprep.subr.mxu0 %v29
  %125 = vmatpush1.msra.mxu0 %v28
  %126 = vmatprep.subr.mxu0 0.0
  %127 = vmatpush2.msra.mxu0 0.0
  %128 = vmatprep.subr.mxu0 0.0
  %129 = vmatpush2.msra.mxu0 0.0
  %130 = vmatprep.subr.mxu0 0.0
  %131 = vmatpush2.msra.mxu0 0.0
  %132 = vmatprep.subr.mxu0 0.0
  %133 = vmatpush2.msra.mxu0 0.0
  %134 = vmatprep.subr.mxu0 0.0
  %135 = vmatpush2.msra.mxu0 0.0
  %136 = vmatprep.subr.mxu0 0.0
  %137 = vmatpush2.msra.mxu0 0.0
  %138 = vmatprep.subr.mxu0 0.0
  %139 = vmatpush2.msra.mxu0 0.0
  %140 = vmatprep.subr.mxu0 0.0
  %141 = vmatpush2.msra.mxu0 0.0
  %142 = vmatprep.subr.mxu0 0.0
  %143 = vmatpush2.msra.mxu0 0.0
  %144 = vmatprep.subr.mxu0 0.0
  %145 = vmatpush2.msra.mxu0 0.0
  %146 = vmatprep.subr.mxu0 0.0
  %147 = vmatpush2.msra.mxu0 0.0
  %148 = vmatprep.subr.mxu0 0.0
  %149 = vmatpush2.msra.mxu0 0.0
  %150 = vmatprep.subr.mxu0 0.0
  %151 = vmatpush2.msra.mxu0 0.0
  %152 = vmatprep.subr.mxu0 0.0
  %153 = vmatpush2.msra.mxu0 0.0
  %154 = vmatprep.subr.mxu0 0.0
  %155 = vmatpush2.msra.mxu0 0.0
  %156 = vmatprep.subr.mxu0 0.0
  %157 = vmatpush2.msra.mxu0 0.0
  %158 = vmatprep.mubr.f32.mxu0 0.0
  %159 = vmatmul.mubr.f32.gmra.mxu0 %v71
  %v160 = vpop.f32.mrf.mxu0
  %v161 = vadd.f32 %v57, %v160
  %v162 = vpop.f32.mrf.mxu0
  %v163 = vadd.f32 %v61, %v162
  %164 = vmatprep.mubr.f32.mxu0 0.0
  %165 = vmatmul.mubr.f32.gmra.mxu0 %v74
  %v166 = vpop.f32.mrf.mxu0
  %v167 = vadd.f32 %v57, %v166
  %v168 = vpop.f32.mrf.mxu0
  %v169 = vadd.f32 %v61, %v168
  %170 = vmatprep.mubr.f32.mxu0 0.0
  %171 = vmatmul.mubr.f32.gmra.mxu0 %v77
  %v172 = vpop.f32.mrf.mxu0
  %v173 = vadd.f32 %v57, %v172
  %v174 = vpop.f32.mrf.mxu0
  %v175 = vadd.f32 %v61, %v174
  %176 = vmatprep.mubr.f32.mxu0 0.0
  %177 = vmatmul.mubr.f32.gmra.mxu0 %v80
  %v178 = vpop.f32.mrf.mxu0
  %v179 = vadd.f32 %v57, %v178
  %v180 = vpop.f32.mrf.mxu0
  %v181 = vadd.f32 %v61, %v180
  %182 = vmatprep.mubr.f32.mxu0 0.0
  %183 = vmatmul.mubr.f32.gmra.mxu0 %v83
  %v184 = vpop.f32.mrf.mxu0
  %v185 = vadd.f32 %v57, %v184
  %v186 = vpop.f32.mrf.mxu0
  %v187 = vadd.f32 %v61, %v186
  %188 = vmatprep.mubr.f32.mxu0 0.0
  %189 = vmatmul.mubr.f32.gmra.mxu0 %v86
  %v190 = vpop.f32.mrf.mxu0
  %v191 = vadd.f32 %v57, %v190
  %v192 = vpop.f32.mrf.mxu0
  %v193 = vadd.f32 %v61, %v192
  %194 = vmatprep.mubr.f32.mxu0 0.0
  %195 = vmatmul.mubr.f32.gmra.mxu0 %v89
  %v196 = vpop.f32.mrf.mxu0
  %v197 = vadd.f32 %v57, %v196
  %v198 = vpop.f32.mrf.mxu0
  %v199 = vadd.f32 %v61, %v198
  %200 = vmatprep.mubr.f32.mxu0 0.0
  %201 = vmatmul.mubr.f32.gmra.mxu0 %v92
  %v202 = vpop.f32.mrf.mxu0
  %v203 = vadd.f32 %v57, %v202
  %v204 = vpop.f32.mrf.mxu0
  %v205 = vadd.f32 %v61, %v204
  %206 = vdwg.mxu0
  %207 = vmatprep.subr.mxu0 0.0
  %208 = vmatpush1.msra.mxu0 0.0
  %209 = vmatprep.subr.mxu0 0.0
  %210 = vmatpush1.msra.mxu0 0.0
  %211 = vmatprep.subr.mxu0 0.0
  %212 = vmatpush1.msra.mxu0 0.0
  %213 = vmatprep.subr.mxu0 0.0
  %214 = vmatpush1.msra.mxu0 0.0
  %215 = vmatprep.subr.mxu0 0.0
  %216 = vmatpush1.msra.mxu0 0.0
  %217 = vmatprep.subr.mxu0 0.0
  %218 = vmatpush1.msra.mxu0 0.0
  %219 = vmatprep.subr.mxu0 0.0
  %220 = vmatpush1.msra.mxu0 0.0
  %221 = vmatprep.subr.mxu0 0.0
  %222 = vmatpush1.msra.mxu0 0.0
  %223 = vmatprep.subr.mxu0 0.0
  %224 = vmatpush1.msra.mxu0 %v51
  %225 = vmatprep.subr.mxu0 0.0
  %226 = vmatpush1.msra.mxu0 %v48
  %227 = vmatprep.subr.mxu0 0.0
  %228 = vmatpush1.msra.mxu0 %v45
  %229 = vmatprep.subr.mxu0 0.0
  %230 = vmatpush1.msra.mxu0 %v42
  %231 = vmatprep.subr.mxu0 0.0
  %232 = vmatpush1.msra.mxu0 %v39
  %233 = vmatprep.subr.mxu0 0.0
  %234 = vmatpush1.msra.mxu0 %v36
  %235 = vmatprep.subr.mxu0 0.0
  %236 = vmatpush1.msra.mxu0 %v33
  %237 = vmatprep.subr.mxu0 0.0
  %238 = vmatpush1.msra.mxu0 %v30
  %239 = vmatprep.subr.mxu0 0.0
  %240 = vmatpush2.msra.mxu0 0.0
  %241 = vmatprep.subr.mxu0 0.0
  %242 = vmatpush2.msra.mxu0 0.0
  %243 = vmatprep.subr.mxu0 0.0
  %244 = vmatpush2.msra.mxu0 0.0
  %245 = vmatprep.subr.mxu0 0.0
  %246 = vmatpush2.msra.mxu0 0.0
  %247 = vmatprep.subr.mxu0 0.0
  %248 = vmatpush2.msra.mxu0 0.0
  %249 = vmatprep.subr.mxu0 0.0
  %250 = vmatpush2.msra.mxu0 0.0
  %251 = vmatprep.subr.mxu0 0.0
  %252 = vmatpush2.msra.mxu0 0.0
  %253 = vmatprep.subr.mxu0 0.0
  %254 = vmatpush2.msra.mxu0 0.0
  %255 = vmatprep.subr.mxu0 0.0
  %256 = vmatpush2.msra.mxu0 0.0
  %257 = vmatprep.subr.mxu0 0.0
  %258 = vmatpush2.msra.mxu0 0.0
  %259 = vmatprep.subr.mxu0 0.0
  %260 = vmatpush2.msra.mxu0 0.0
  %261 = vmatprep.subr.mxu0 0.0
  %262 = vmatpush2.msra.mxu0 0.0
  %263 = vmatprep.subr.mxu0 0.0
  %264 = vmatpush2.msra.mxu0 0.0
  %265 = vmatprep.subr.mxu0 0.0
  %266 = vmatpush2.msra.mxu0 0.0
  %267 = vmatprep.subr.mxu0 0.0
  %268 = vmatpush2.msra.mxu0 0.0
  %269 = vmatprep.subr.mxu0 0.0
  %270 = vmatpush2.msra.mxu0 0.0
  %271 = vmatprep.mubr.f32.mxu0 0.0
  %272 = vmatmul.mubr.f32.gmra.mxu0 %v71
  %v273 = vpop.f32.mrf.mxu0
  %v274 = vadd.f32 %v65, %v273
  %v275 = vpop.f32.mrf.mxu0
  %276 = vmatprep.mubr.f32.mxu0 0.0
  %277 = vmatmul.mubr.f32.gmra.mxu0 %v74
  %v278 = vpop.f32.mrf.mxu0
  %v279 = vadd.f32 %v65, %v278
  %v280 = vpop.f32.mrf.mxu0
  %281 = vmatprep.mubr.f32.mxu0 0.0
  %282 = vmatmul.mubr.f32.gmra.mxu0 %v77
  %v283 = vpop.f32.mrf.mxu0
  %v284 = vadd.f32 %v65, %v283
  %v285 = vpop.f32.mrf.mxu0
  %286 = vmatprep.mubr.f32.mxu0 0.0
  %287 = vmatmul.mubr.f32.gmra.mxu0 %v80
  %v288 = vpop.f32.mrf.mxu0
  %v289 = vadd.f32 %v65, %v288
  %v290 = vpop.f32.mrf.mxu0
  %291 = vmatprep.mubr.f32.mxu0 0.0
  %292 = vmatmul.mubr.f32.gmra.mxu0 %v83
  %v293 = vpop.f32.mrf.mxu0
  %v294 = vadd.f32 %v65, %v293
  %v295 = vpop.f32.mrf.mxu0
  %296 = vmatprep.mubr.f32.mxu0 0.0
  %297 = vmatmul.mubr.f32.gmra.mxu0 %v86
  %v298 = vpop.f32.mrf.mxu0
  %v299 = vadd.f32 %v65, %v298
  %v300 = vpop.f32.mrf.mxu0
  %301 = vmatprep.mubr.f32.mxu0 0.0
  %302 = vmatmul.mubr.f32.gmra.mxu0 %v89
  %v303 = vpop.f32.mrf.mxu0
  %v304 = vadd.f32 %v65, %v303
  %v305 = vpop.f32.mrf.mxu0
  %306 = vmatprep.mubr.f32.mxu0 0.0
  %307 = vmatmul.mubr.f32.gmra.mxu0 %v92
  %v308 = vpop.f32.mrf.mxu0
  %v309 = vadd.f32 %v65, %v308
  %v310 = vpop.f32.mrf.mxu0
  %311 = vdwg.mxu0
  %312 = vst [vmem:[#allocation2] sm:$0xff] %v161
  %313 = vst [vmem:[#allocation2 + $0x8] sm:$0xff] %v163
  %314 = vst [vmem:[#allocation2 + $0x10] sm:$0xff] %v274
  %315 = vst [vmem:[#allocation2 + $0x18] sm:$0xff] %v167
  %316 = vst [vmem:[#allocation2 + $0x20] sm:$0xff] %v169
  %317 = vst [vmem:[#allocation2 + $0x28] sm:$0xff] %v279
  %318 = vst [vmem:[#allocation2 + $0x30] sm:$0xff] %v173
  %319 = vst [vmem:[#allocation2 + $0x38] sm:$0xff] %v175
  %320 = vst [vmem:[#allocation2 + $0x40] sm:$0xff] %v284
  %321 = vst [vmem:[#allocation2 + $0x48] sm:$0xff] %v179
  %322 = vst [vmem:[#allocation2 + $0x50] sm:$0xff] %v181
  %323 = vst [vmem:[#allocation2 + $0x58] sm:$0xff] %v289
  %324 = vst [vmem:[#allocation2 + $0x60] sm:$0xff] %v185
  %325 = vst [vmem:[#allocation2 + $0x68] sm:$0xff] %v187
  %326 = vst [vmem:[#allocation2 + $0x70] sm:$0xff] %v294
  %327 = vst [vmem:[#allocation2 + $0x78] sm:$0xff] %v191
  %328 = vst [vmem:[#allocation2 + $0x80] sm:$0xff] %v193
  %329 = vst [vmem:[#allocation2 + $0x88] sm:$0xff] %v299
  %330 = vst [vmem:[#allocation2 + $0x90] sm:$0xff] %v197
  %331 = vst [vmem:[#allocation2 + $0x98] sm:$0xff] %v199
  %332 = vst [vmem:[#allocation2 + $0xa0] sm:$0xff] %v304
  %333 = vst [vmem:[#allocation2 + $0xa8] sm:$0xff] %v203
  %334 = vst [vmem:[#allocation2 + $0xb0] sm:$0xff] %v205
  %335 = vst [vmem:[#allocation2 + $0xb8] sm:$0xff] %v309
  %v336 = vld [vmem:[%s2] sm:$0xff]
  %v337 = vld [vmem:[%s2 + $0x8] sm:$0xff]
  %v338 = vld [vmem:[%s2 + $0x10] sm:$0xff]
  %v339 = vld [vmem:[%s2 + $0x18] sm:$0xff]
  %v340 = vld [vmem:[%s2 + $0x20] sm:$0xff]
  %v341 = vld [vmem:[%s2 + $0x28] sm:$0xff]
  %v342 = vld [vmem:[%s2 + $0x30] sm:$0xff]
  %v343 = vld [vmem:[%s2 + $0x38] sm:$0xff]
  %v344 = vld [vmem:[%s2 + $0x40] sm:$0xff]
  %v345 = vld [vmem:[%s2 + $0x48] sm:$0xff]
  %v346 = vld [vmem:[%s2 + $0x50] sm:$0xff]
  %v347 = vld [vmem:[%s2 + $0x58] sm:$0xff]
  %v348 = vld [vmem:[%s2 + $0x60] sm:$0xff]
  %v349 = vld [vmem:[%s2 + $0x68] sm:$0xff]
  %v350 = vld [vmem:[%s2 + $0x70] sm:$0xff]
  %v351 = vld [vmem:[%s2 + $0x78] sm:$0xff]
  %v352 = vld [vmem:[%s2 + $0x80] sm:$0xff]
  %v353 = vld [vmem:[%s2 + $0x88] sm:$0xff]
  %v354 = vld [vmem:[%s2 + $0x90] sm:$0xff]
  %v355 = vld [vmem:[%s2 + $0x98] sm:$0xff]
  %v356 = vld [vmem:[%s2 + $0xa0] sm:$0xff]
  %v357 = vld [vmem:[%s2 + $0xa8] sm:$0xff]
  %v358 = vld [vmem:[%s2 + $0xb0] sm:$0xff]
  %v359 = vld [vmem:[%s2 + $0xb8] sm:$0xff]
  %v360 = vld [vmem:[%s2 + $0xc0] sm:$0xff]
  %v361 = vld [vmem:[%s2 + $0xc8] sm:$0xff]
  %v362 = vld [vmem:[%s2 + $0xd0] sm:$0xff]
  %v363 = vld [vmem:[%s2 + $0xd8] sm:$0xff]
  %v364 = vld [vmem:[%s2 + $0xe0] sm:$0xff]
  %v365 = vld [vmem:[%s2 + $0xe8] sm:$0xff]
  %v366 = vld [vmem:[%s2 + $0xf0] sm:$0xff]
  %v367 = vld [vmem:[%s2 + $0xf8] sm:$0xff]
  %v368 = vld [vmem:[%s2 + $0x100] sm:$0xff]
  %v369 = vld [vmem:[%s2 + $0x108] sm:$0xff]
  %v370 = vld [vmem:[%s2 + $0x110] sm:$0xff]
  %v371 = vld [vmem:[%s2 + $0x118] sm:$0xff]
  %v372 = vld [vmem:[%s2 + $0x120] sm:$0xff]
  %v373 = vld [vmem:[%s2 + $0x128] sm:$0xff]
  %v374 = vld [vmem:[%s2 + $0x130] sm:$0xff]
  %v375 = vld [vmem:[%s2 + $0x138] sm:$0xff]
  %v376 = vld [vmem:[%s2 + $0x140] sm:$0xff]
  %v377 = vld [vmem:[%s2 + $0x148] sm:$0xff]
  %v378 = vld [vmem:[%s2 + $0x150] sm:$0xff]
  %v379 = vld [vmem:[%s2 + $0x158] sm:$0xff]
  %v380 = vld [vmem:[%s2 + $0x160] sm:$0xff]
  %v381 = vld [vmem:[%s2 + $0x168] sm:$0xff]
  %v382 = vld [vmem:[%s2 + $0x170] sm:$0xff]
  %v383 = vld [vmem:[%s2 + $0x178] sm:$0xff]
  %v384 = vld [vmem:[%s4 + $0x1] sm:$0x1]
  %v385 = vlaneseq
  %v386 = vshrl.u32 %v385, 7
  %v387 = vsub.s32 0, %v386
  %v388 = vrot.slane %v384, %v387
  %s389 = smul.u32 0, 3
  %s390 = smul.addr %s389, 8
  %s391 = scalar_lea.vmem [#allocation2], %s390
  %v392 = vld [vmem:[%s391] sm:$0xff]
  %v393 = vld [vmem:[%s391 + $0x8] sm:$0xff]
  %v394 = vld [vmem:[%s391 + $0x10] sm:$0xff]
  %395 = vmatprep.subr.mxu0 %v382
  %396 = vmatpush1.msra.mxu0 %v381
  %397 = vmatprep.subr.mxu0 %v379
  %398 = vmatpush1.msra.mxu0 %v378
  %399 = vmatprep.subr.mxu0 %v376
  %400 = vmatpush1.msra.mxu0 %v375
  %401 = vmatprep.subr.mxu0 %v373
  %402 = vmatpush1.msra.mxu0 %v372
  %403 = vmatprep.subr.mxu0 %v370
  %404 = vmatpush1.msra.mxu0 %v369
  %405 = vmatprep.subr.mxu0 %v367
  %406 = vmatpush1.msra.mxu0 %v366
  %407 = vmatprep.subr.mxu0 %v364
  %408 = vmatpush1.msra.mxu0 %v363
  %409 = vmatprep.subr.mxu0 %v361
  %410 = vmatpush1.msra.mxu0 %v360
  %411 = vmatprep.subr.mxu0 %v358
  %412 = vmatpush1.msra.mxu0 %v357
  %413 = vmatprep.subr.mxu0 %v355
  %414 = vmatpush1.msra.mxu0 %v354
  %415 = vmatprep.subr.mxu0 %v352
  %416 = vmatpush1.msra.mxu0 %v351
  %417 = vmatprep.subr.mxu0 %v349
  %418 = vmatpush1.msra.mxu0 %v348
  %419 = vmatprep.subr.mxu0 %v346
  %420 = vmatpush1.msra.mxu0 %v345
  %421 = vmatprep.subr.mxu0 %v343
  %422 = vmatpush1.msra.mxu0 %v342
  %423 = vmatprep.subr.mxu0 %v340
  %424 = vmatpush1.msra.mxu0 %v339
  %425 = vmatprep.subr.mxu0 %v337
  %426 = vmatpush1.msra.mxu0 %v336
  %427 = vmatprep.subr.mxu0 0.0
  %428 = vmatpush2.msra.mxu0 0.0
  %429 = vmatprep.subr.mxu0 0.0
  %430 = vmatpush2.msra.mxu0 0.0
  %431 = vmatprep.subr.mxu0 0.0
  %432 = vmatpush2.msra.mxu0 0.0
  %433 = vmatprep.subr.mxu0 0.0
  %434 = vmatpush2.msra.mxu0 0.0
  %435 = vmatprep.subr.mxu0 0.0
  %436 = vmatpush2.msra.mxu0 0.0
  %437 = vmatprep.subr.mxu0 0.0
  %438 = vmatpush2.msra.mxu0 0.0
  %439 = vmatprep.subr.mxu0 0.0
  %440 = vmatpush2.msra.mxu0 0.0
  %441 = vmatprep.subr.mxu0 0.0
  %442 = vmatpush2.msra.mxu0 0.0
  %443 = vmatprep.subr.mxu0 0.0
  %444 = vmatpush2.msra.mxu0 0.0
  %445 = vmatprep.subr.mxu0 0.0
  %446 = vmatpush2.msra.mxu0 0.0
  %447 = vmatprep.subr.mxu0 0.0
  %448 = vmatpush2.msra.mxu0 0.0
  %449 = vmatprep.subr.mxu0 0.0
  %450 = vmatpush2.msra.mxu0 0.0
  %451 = vmatprep.subr.mxu0 0.0
  %452 = vmatpush2.msra.mxu0 0.0
  %453 = vmatprep.subr.mxu0 0.0
  %454 = vmatpush2.msra.mxu0 0.0
  %455 = vmatprep.subr.mxu0 0.0
  %456 = vmatpush2.msra.mxu0 0.0
  %457 = vmatprep.subr.mxu0 0.0
  %458 = vmatpush2.msra.mxu0 0.0
  %459 = vmatprep.mubr.f32.mxu0 0.0
  %460 = vmatmul.mubr.f32.gmra.mxu0 0.0
  %v461 = vpop.f32.mrf.mxu0
  %v462 = vadd.f32 0.0, %v461
  %v463 = vpop.f32.mrf.mxu0
  %v464 = vadd.f32 0.0, %v463
  %465 = vdwg.mxu0
  %466 = vmatprep.subr.mxu0 0.0
  %467 = vmatpush1.msra.mxu0 %v383
  %468 = vmatprep.subr.mxu0 0.0
  %469 = vmatpush1.msra.mxu0 %v380
  %470 = vmatprep.subr.mxu0 0.0
  %471 = vmatpush1.msra.mxu0 %v377
  %472 = vmatprep.subr.mxu0 0.0
  %473 = vmatpush1.msra.mxu0 %v374
  %474 = vmatprep.subr.mxu0 0.0
  %475 = vmatpush1.msra.mxu0 %v371
  %476 = vmatprep.subr.mxu0 0.0
  %477 = vmatpush1.msra.mxu0 %v368
  %478 = vmatprep.subr.mxu0 0.0
  %479 = vmatpush1.msra.mxu0 %v365
  %480 = vmatprep.subr.mxu0 0.0
  %481 = vmatpush1.msra.mxu0 %v362
  %482 = vmatprep.subr.mxu0 0.0
  %483 = vmatpush1.msra.mxu0 %v359
  %484 = vmatprep.subr.mxu0 0.0
  %485 = vmatpush1.msra.mxu0 %v356
  %486 = vmatprep.subr.mxu0 0.0
  %487 = vmatpush1.msra.mxu0 %v353
  %488 = vmatprep.subr.mxu0 0.0
  %489 = vmatpush1.msra.mxu0 %v350
  %490 = vmatprep.subr.mxu0 0.0
  %491 = vmatpush1.msra.mxu0 %v347
  %492 = vmatprep.subr.mxu0 0.0
  %493 = vmatpush1.msra.mxu0 %v344
  %494 = vmatprep.subr.mxu0 0.0
  %495 = vmatpush1.msra.mxu0 %v341
  %496 = vmatprep.subr.mxu0 0.0
  %497 = vmatpush1.msra.mxu0 %v338
  %498 = vmatprep.subr.mxu0 0.0
  %499 = vmatpush2.msra.mxu0 0.0
  %500 = vmatprep.subr.mxu0 0.0
  %501 = vmatpush2.msra.mxu0 0.0
  %502 = vmatprep.subr.mxu0 0.0
  %503 = vmatpush2.msra.mxu0 0.0
  %504 = vmatprep.subr.mxu0 0.0
  %505 = vmatpush2.msra.mxu0 0.0
  %506 = vmatprep.subr.mxu0 0.0
  %507 = vmatpush2.msra.mxu0 0.0
  %508 = vmatprep.subr.mxu0 0.0
  %509 = vmatpush2.msra.mxu0 0.0
  %510 = vmatprep.subr.mxu0 0.0
  %511 = vmatpush2.msra.mxu0 0.0
  %512 = vmatprep.subr.mxu0 0.0
  %513 = vmatpush2.msra.mxu0 0.0
  %514 = vmatprep.subr.mxu0 0.0
  %515 = vmatpush2.msra.mxu0 0.0
  %516 = vmatprep.subr.mxu0 0.0
  %517 = vmatpush2.msra.mxu0 0.0
  %518 = vmatprep.subr.mxu0 0.0
  %519 = vmatpush2.msra.mxu0 0.0
  %520 = vmatprep.subr.mxu0 0.0
  %521 = vmatpush2.msra.mxu0 0.0
  %522 = vmatprep.subr.mxu0 0.0
  %523 = vmatpush2.msra.mxu0 0.0
  %524 = vmatprep.subr.mxu0 0.0
  %525 = vmatpush2.msra.mxu0 0.0
  %526 = vmatprep.subr.mxu0 0.0
  %527 = vmatpush2.msra.mxu0 0.0
  %528 = vmatprep.subr.mxu0 0.0
  %529 = vmatpush2.msra.mxu0 0.0
  %530 = vmatprep.mubr.f32.mxu0 0.0
  %531 = vmatmul.mubr.f32.gmra.mxu0 0.0
  %v532 = vpop.f32.mrf.mxu0
  %v533 = vadd.f32 0.0, %v532
  %v534 = vpop.f32.mrf.mxu0
  %535 = vdwg.mxu0
  %v536 = vadd.f32 %v392, %v462
  %v537 = vadd.f32 %v393, %v464
  %v538 = vxor.u32 %v536, 2147483648
  %v539 = vxor.u32 %v537, 2147483648
  %v540 = vmul.f32 %v538, 1.442695
  %v541 = vpow.pop %v540
  %v542 = vmul.f32 %v539, 1.442695
  %v543 = vpow.pop %v542
  %v544 = vadd.f32 %v541, 1.0
  %v545 = vadd.f32 %v543, 1.0
  %v546 = vrcp.pop %v544
  %v547 = vmul.f32 1.0, %v546
  %v548 = vrcp.pop %v545
  %v549 = vmul.f32 1.0, %v548
  %v550 = vadd.f32 %v533, %v388
  %v551 = vmul.f32 %v547, %v550
  %v552 = vadd.f32 %v394, %v551
  %v553 = vtanh.pop %v552
  %v554 = vsub.f32 1.0, %v549
  %v555 = vmul.f32 %v554, %v553
  %v556 = vmul.f32 %v549, 0.0
  %v557 = vadd.f32 %v555, %v556
  %558 = vst [vmem:[#allocation3] sm:$0xff] %v557
  %s559 = scalar_lea.vmem [#allocation4], 56
  %560 = vst [vmem:[%s559] sm:$0xff] %v557
  %s561 = smul.u32 1, 3
  %s562 = smul.addr %s561, 8
  %s563 = scalar_lea.vmem [#allocation2], %s562
  %v564 = vld [vmem:[%s563] sm:$0xff]
  %v565 = vld [vmem:[%s563 + $0x8] sm:$0xff]
  %v566 = vld [vmem:[%s563 + $0x10] sm:$0xff]
  %567 = vmatprep.subr.mxu0 %v382
  %568 = vmatpush1.msra.mxu0 %v381
  %569 = vmatprep.subr.mxu0 %v379
  %570 = vmatpush1.msra.mxu0 %v378
  %571 = vmatprep.subr.mxu0 %v376
  %572 = vmatpush1.msra.mxu0 %v375
  %573 = vmatprep.subr.mxu0 %v373
  %574 = vmatpush1.msra.mxu0 %v372
  %575 = vmatprep.subr.mxu0 %v370
  %576 = vmatpush1.msra.mxu0 %v369
  %577 = vmatprep.subr.mxu0 %v367
  %578 = vmatpush1.msra.mxu0 %v366
  %579 = vmatprep.subr.mxu0 %v364
  %580 = vmatpush1.msra.mxu0 %v363
  %581 = vmatprep.subr.mxu0 %v361
  %582 = vmatpush1.msra.mxu0 %v360
  %583 = vmatprep.subr.mxu0 %v358
  %584 = vmatpush1.msra.mxu0 %v357
  %585 = vmatprep.subr.mxu0 %v355
  %586 = vmatpush1.msra.mxu0 %v354
  %587 = vmatprep.subr.mxu0 %v352
  %588 = vmatpush1.msra.mxu0 %v351
  %589 = vmatprep.subr.mxu0 %v349
  %590 = vmatpush1.msra.mxu0 %v348
  %591 = vmatprep.subr.mxu0 %v346
  %592 = vmatpush1.msra.mxu0 %v345
  %593 = vmatprep.subr.mxu0 %v343
  %594 = vmatpush1.msra.mxu0 %v342
  %595 = vmatprep.subr.mxu0 %v340
  %596 = vmatpush1.msra.mxu0 %v339
  %597 = vmatprep.subr.mxu0 %v337
  %598 = vmatpush1.msra.mxu0 %v336
  %599 = vmatprep.subr.mxu0 0.0
  %600 = vmatpush2.msra.mxu0 0.0
  %601 = vmatprep.subr.mxu0 0.0
  %602 = vmatpush2.msra.mxu0 0.0
  %603 = vmatprep.subr.mxu0 0.0
  %604 = vmatpush2.msra.mxu0 0.0
  %605 = vmatprep.subr.mxu0 0.0
  %606 = vmatpush2.msra.mxu0 0.0
  %607 = vmatprep.subr.mxu0 0.0
  %608 = vmatpush2.msra.mxu0 0.0
  %609 = vmatprep.subr.mxu0 0.0
  %610 = vmatpush2.msra.mxu0 0.0
  %611 = vmatprep.subr.mxu0 0.0
  %612 = vmatpush2.msra.mxu0 0.0
  %613 = vmatprep.subr.mxu0 0.0
  %614 = vmatpush2.msra.mxu0 0.0
  %615 = vmatprep.subr.mxu0 0.0
  %616 = vmatpush2.msra.mxu0 0.0
  %617 = vmatprep.subr.mxu0 0.0
  %618 = vmatpush2.msra.mxu0 0.0
  %619 = vmatprep.subr.mxu0 0.0
  %620 = vmatpush2.msra.mxu0 0.0
  %621 = vmatprep.subr.mxu0 0.0
  %622 = vmatpush2.msra.mxu0 0.0
  %623 = vmatprep.subr.mxu0 0.0
  %624 = vmatpush2.msra.mxu0 0.0
  %625 = vmatprep.subr.mxu0 0.0
  %626 = vmatpush2.msra.mxu0 0.0
  %627 = vmatprep.subr.mxu0 0.0
  %628 = vmatpush2.msra.mxu0 0.0
  %629 = vmatprep.subr.mxu0 0.0
  %630 = vmatpush2.msra.mxu0 0.0
  %631 = vmatprep.mubr.f32.mxu0 0.0
  %632 = vmatmul.mubr.f32.gmra.mxu0 %v557
  %v633 = vpop.f32.mrf.mxu0
  %v634 = vadd.f32 0.0, %v633
  %v635 = vpop.f32.mrf.mxu0
  %v636 = vadd.f32 0.0, %v635
  %637 = vdwg.mxu0
  %638 = vmatprep.subr.mxu0 0.0
  %639 = vmatpush1.msra.mxu0 %v383
  %640 = vmatprep.subr.mxu0 0.0
  %641 = vmatpush1.msra.mxu0 %v380
  %642 = vmatprep.subr.mxu0 0.0
  %643 = vmatpush1.msra.mxu0 %v377
  %644 = vmatprep.subr.mxu0 0.0
  %645 = vmatpush1.msra.mxu0 %v374
  %646 = vmatprep.subr.mxu0 0.0
  %647 = vmatpush1.msra.mxu0 %v371
  %648 = vmatprep.subr.mxu0 0.0
  %649 = vmatpush1.msra.mxu0 %v368
  %650 = vmatprep.subr.mxu0 0.0
  %651 = vmatpush1.msra.mxu0 %v365
  %652 = vmatprep.subr.mxu0 0.0
  %653 = vmatpush1.msra.mxu0 %v362
  %654 = vmatprep.subr.mxu0 0.0
  %655 = vmatpush1.msra.mxu0 %v359
  %656 = vmatprep.subr.mxu0 0.0
  %657 = vmatpush1.msra.mxu0 %v356
  %658 = vmatprep.subr.mxu0 0.0
  %659 = vmatpush1.msra.mxu0 %v353
  %660 = vmatprep.subr.mxu0 0.0
  %661 = vmatpush1.msra.mxu0 %v350
  %662 = vmatprep.subr.mxu0 0.0
  %663 = vmatpush1.msra.mxu0 %v347
  %664 = vmatprep.subr.mxu0 0.0
  %665 = vmatpush1.msra.mxu0 %v344
  %666 = vmatprep.subr.mxu0 0.0
  %667 = vmatpush1.msra.mxu0 %v341
  %668 = vmatprep.subr.mxu0 0.0
  %669 = vmatpush1.msra.mxu0 %v338
  %670 = vmatprep.subr.mxu0 0.0
  %671 = vmatpush2.msra.mxu0 0.0
  %672 = vmatprep.subr.mxu0 0.0
  %673 = vmatpush2.msra.mxu0 0.0
  %674 = vmatprep.subr.mxu0 0.0
  %675 = vmatpush2.msra.mxu0 0.0
  %676 = vmatprep.subr.mxu0 0.0
  %677 = vmatpush2.msra.mxu0 0.0
  %678 = vmatprep.subr.mxu0 0.0
  %679 = vmatpush2.msra.mxu0 0.0
  %680 = vmatprep.subr.mxu0 0.0
  %681 = vmatpush2.msra.mxu0 0.0
  %682 = vmatprep.subr.mxu0 0.0
  %683 = vmatpush2.msra.mxu0 0.0
  %684 = vmatprep.subr.mxu0 0.0
  %685 = vmatpush2.msra.mxu0 0.0
  %686 = vmatprep.subr.mxu0 0.0
  %687 = vmatpush2.msra.mxu0 0.0
  %688 = vmatprep.subr.mxu0 0.0
  %689 = vmatpush2.msra.mxu0 0.0
  %690 = vmatprep.subr.mxu0 0.0
  %691 = vmatpush2.msra.mxu0 0.0
  %692 = vmatprep.subr.mxu0 0.0
  %693 = vmatpush2.msra.mxu0 0.0
  %694 = vmatprep.subr.mxu0 0.0
  %695 = vmatpush2.msra.mxu0 0.0
  %696 = vmatprep.subr.mxu0 0.0
  %697 = vmatpush2.msra.mxu0 0.0
  %698 = vmatprep.subr.mxu0 0.0
  %699 = vmatpush2.msra.mxu0 0.0
  %700 = vmatprep.subr.mxu0 0.0
  %701 = vmatpush2.msra.mxu0 0.0
  %702 = vmatprep.mubr.f32.mxu0 0.0
  %703 = vmatmul.mubr.f32.gmra.mxu0 %v557
  %v704 = vpop.f32.mrf.mxu0
  %v705 = vadd.f32 0.0, %v704
  %v706 = vpop.f32.mrf.mxu0
  %707 = vdwg.mxu0
  %v708 = vadd.f32 %v564, %v634
  %v709 = vadd.f32 %v565, %v636
  %v710 = vxor.u32 %v708, 2147483648
  %v711 = vxor.u32 %v709, 2147483648
  %v712 = vmul.f32 %v710, 1.442695
  %v713 = vpow.pop %v712
  %v714 = vmul.f32 %v711, 1.442695
  %v715 = vpow.pop %v714
  %v716 = vadd.f32 %v713, 1.0
  %v717 = vadd.f32 %v715, 1.0
  %v718 = vrcp.pop %v716
  %v719 = vmul.f32 1.0, %v718
  %v720 = vrcp.pop %v717
  %v721 = vmul.f32 1.0, %v720
  %v722 = vadd.f32 %v705, %v388
  %v723 = vmul.f32 %v719, %v722
  %v724 = vadd.f32 %v566, %v723
  %v725 = vtanh.pop %v724
  %v726 = vsub.f32 1.0, %v721
  %v727 = vmul.f32 %v726, %v725
  %v728 = vmul.f32 %v721, %v557
  %v729 = vadd.f32 %v727, %v728
  %s730 = scalar_lea.vmem [#allocation3], 8
  %731 = vst [vmem:[%s730] sm:$0xff] %v729
  %s732 = scalar_lea.vmem [#allocation4], 48
  %733 = vst [vmem:[%s732] sm:$0xff] %v729
  %s734 = smul.u32 2, 3
  %s735 = smul.addr %s734, 8
  %s736 = scalar_lea.vmem [#allocation2], %s735
  %v737 = vld [vmem:[%s736] sm:$0xff]
  %v738 = vld [vmem:[%s736 + $0x8] sm:$0xff]
  %v739 = vld [vmem:[%s736 + $0x10] sm:$0xff]
  %740 = vmatprep.subr.mxu0 %v382
  %741 = vmatpush1.msra.mxu0 %v381
  %742 = vmatprep.subr.mxu0 %v379
  %743 = vmatpush1.msra.mxu0 %v378
  %744 = vmatprep.subr.mxu0 %v376
  %745 = vmatpush1.msra.mxu0 %v375
  %746 = vmatprep.subr.mxu0 %v373
  %747 = vmatpush1.msra.mxu0 %v372
  %748 = vmatprep.subr.mxu0 %v370
  %749 = vmatpush1.msra.mxu0 %v369
  %750 = vmatprep.subr.mxu0 %v367
  %751 = vmatpush1.msra.mxu0 %v366
  %752 = vmatprep.subr.mxu0 %v364
  %753 = vmatpush1.msra.mxu0 %v363
  %754 = vmatprep.subr.mxu0 %v361
  %755 = vmatpush1.msra.mxu0 %v360
  %756 = vmatprep.subr.mxu0 %v358
  %757 = vmatpush1.msra.mxu0 %v357
  %758 = vmatprep.subr.mxu0 %v355
  %759 = vmatpush1.msra.mxu0 %v354
  %760 = vmatprep.subr.mxu0 %v352
  %761 = vmatpush1.msra.mxu0 %v351
  %762 = vmatprep.subr.mxu0 %v349
  %763 = vmatpush1.msra.mxu0 %v348
  %764 = vmatprep.subr.mxu0 %v346
  %765 = vmatpush1.msra.mxu0 %v345
  %766 = vmatprep.subr.mxu0 %v343
  %767 = vmatpush1.msra.mxu0 %v342
  %768 = vmatprep.subr.mxu0 %v340
  %769 = vmatpush1.msra.mxu0 %v339
  %770 = vmatprep.subr.mxu0 %v337
  %771 = vmatpush1.msra.mxu0 %v336
  %772 = vmatprep.subr.mxu0 0.0
  %773 = vmatpush2.msra.mxu0 0.0
  %774 = vmatprep.subr.mxu0 0.0
  %775 = vmatpush2.msra.mxu0 0.0
  %776 = vmatprep.subr.mxu0 0.0
  %777 = vmatpush2.msra.mxu0 0.0
  %778 = vmatprep.subr.mxu0 0.0
  %779 = vmatpush2.msra.mxu0 0.0
  %780 = vmatprep.subr.mxu0 0.0
  %781 = vmatpush2.msra.mxu0 0.0
  %782 = vmatprep.subr.mxu0 0.0
  %783 = vmatpush2.msra.mxu0 0.0
  %784 = vmatprep.subr.mxu0 0.0
  %785 = vmatpush2.msra.mxu0 0.0
  %786 = vmatprep.subr.mxu0 0.0
  %787 = vmatpush2.msra.mxu0 0.0
  %788 = vmatprep.subr.mxu0 0.0
  %789 = vmatpush2.msra.mxu0 0.0
  %790 = vmatprep.subr.mxu0 0.0
  %791 = vmatpush2.msra.mxu0 0.0
  %792 = vmatprep.subr.mxu0 0.0
  %793 = vmatpush2.msra.mxu0 0.0
  %794 = vmatprep.subr.mxu0 0.0
  %795 = vmatpush2.msra.mxu0 0.0
  %796 = vmatprep.subr.mxu0 0.0
  %797 = vmatpush2.msra.mxu0 0.0
  %798 = vmatprep.subr.mxu0 0.0
  %799 = vmatpush2.msra.mxu0 0.0
  %800 = vmatprep.subr.mxu0 0.0
  %801 = vmatpush2.msra.mxu0 0.0
  %802 = vmatprep.subr.mxu0 0.0
  %803 = vmatpush2.msra.mxu0 0.0
  %804 = vmatprep.mubr.f32.mxu0 0.0
  %805 = vmatmul.mubr.f32.gmra.mxu0 %v729
  %v806 = vpop.f32.mrf.mxu0
  %v807 = vadd.f32 0.0, %v806
  %v808 = vpop.f32.mrf.mxu0
  %v809 = vadd.f32 0.0, %v808
  %810 = vdwg.mxu0
  %811 = vmatprep.subr.mxu0 0.0
  %812 = vmatpush1.msra.mxu0 %v383
  %813 = vmatprep.subr.mxu0 0.0
  %814 = vmatpush1.msra.mxu0 %v380
  %815 = vmatprep.subr.mxu0 0.0
  %816 = vmatpush1.msra.mxu0 %v377
  %817 = vmatprep.subr.mxu0 0.0
  %818 = vmatpush1.msra.mxu0 %v374
  %819 = vmatprep.subr.mxu0 0.0
  %820 = vmatpush1.msra.mxu0 %v371
  %821 = vmatprep.subr.mxu0 0.0
  %822 = vmatpush1.msra.mxu0 %v368
  %823 = vmatprep.subr.mxu0 0.0
  %824 = vmatpush1.msra.mxu0 %v365
  %825 = vmatprep.subr.mxu0 0.0
  %826 = vmatpush1.msra.mxu0 %v362
  %827 = vmatprep.subr.mxu0 0.0
  %828 = vmatpush1.msra.mxu0 %v359
  %829 = vmatprep.subr.mxu0 0.0
  %830 = vmatpush1.msra.mxu0 %v356
  %831 = vmatprep.subr.mxu0 0.0
  %832 = vmatpush1.msra.mxu0 %v353
  %833 = vmatprep.subr.mxu0 0.0
  %834 = vmatpush1.msra.mxu0 %v350
  %835 = vmatprep.subr.mxu0 0.0
  %836 = vmatpush1.msra.mxu0 %v347
  %837 = vmatprep.subr.mxu0 0.0
  %838 = vmatpush1.msra.mxu0 %v344
  %839 = vmatprep.subr.mxu0 0.0
  %840 = vmatpush1.msra.mxu0 %v341
  %841 = vmatprep.subr.mxu0 0.0
  %842 = vmatpush1.msra.mxu0 %v338
  %843 = vmatprep.subr.mxu0 0.0
  %844 = vmatpush2.msra.mxu0 0.0
  %845 = vmatprep.subr.mxu0 0.0
  %846 = vmatpush2.msra.mxu0 0.0
  %847 = vmatprep.subr.mxu0 0.0
  %848 = vmatpush2.msra.mxu0 0.0
  %849 = vmatprep.subr.mxu0 0.0
  %850 = vmatpush2.msra.mxu0 0.0
  %851 = vmatprep.subr.mxu0 0.0
  %852 = vmatpush2.msra.mxu0 0.0
  %853 = vmatprep.subr.mxu0 0.0
  %854 = vmatpush2.msra.mxu0 0.0
  %855 = vmatprep.subr.mxu0 0.0
  %856 = vmatpush2.msra.mxu0 0.0
  %857 = vmatprep.subr.mxu0 0.0
  %858 = vmatpush2.msra.mxu0 0.0
  %859 = vmatprep.subr.mxu0 0.0
  %860 = vmatpush2.msra.mxu0 0.0
  %861 = vmatprep.subr.mxu0 0.0
  %862 = vmatpush2.msra.mxu0 0.0
  %863 = vmatprep.subr.mxu0 0.0
  %864 = vmatpush2.msra.mxu0 0.0
  %865 = vmatprep.subr.mxu0 0.0
  %866 = vmatpush2.msra.mxu0 0.0
  %867 = vmatprep.subr.mxu0 0.0
  %868 = vmatpush2.msra.mxu0 0.0
  %869 = vmatprep.subr.mxu0 0.0
  %870 = vmatpush2.msra.mxu0 0.0
  %871 = vmatprep.subr.mxu0 0.0
  %872 = vmatpush2.msra.mxu0 0.0
  %873 = vmatprep.subr.mxu0 0.0
  %874 = vmatpush2.msra.mxu0 0.0
  %875 = vmatprep.mubr.f32.mxu0 0.0
  %876 = vmatmul.mubr.f32.gmra.mxu0 %v729
  %v877 = vpop.f32.mrf.mxu0
  %v878 = vadd.f32 0.0, %v877
  %v879 = vpop.f32.mrf.mxu0
  %880 = vdwg.mxu0
  %v881 = vadd.f32 %v737, %v807
  %v882 = vadd.f32 %v738, %v809
  %v883 = vxor.u32 %v881, 2147483648
  %v884 = vxor.u32 %v882, 2147483648
  %v885 = vmul.f32 %v883, 1.442695
  %v886 = vpow.pop %v885
  %v887 = vmul.f32 %v884, 1.442695
  %v888 = vpow.pop %v887
  %v889 = vadd.f32 %v886, 1.0
  %v890 = vadd.f32 %v888, 1.0
  %v891 = vrcp.pop %v889
  %v892 = vmul.f32 1.0, %v891
  %v893 = vrcp.pop %v890
  %v894 = vmul.f32 1.0, %v893
  %v895 = vadd.f32 %v878, %v388
  %v896 = vmul.f32 %v892, %v895
  %v897 = vadd.f32 %v739, %v896
  %v898 = vtanh.pop %v897
  %v899 = vsub.f32 1.0, %v894
  %v900 = vmul.f32 %v899, %v898
  %v901 = vmul.f32 %v894, %v729
  %v902 = vadd.f32 %v900, %v901
  %s903 = scalar_lea.vmem [#allocation3], 16
  %904 = vst [vmem:[%s903] sm:$0xff] %v902
  %s905 = scalar_lea.vmem [#allocation4], 40
  %906 = vst [vmem:[%s905] sm:$0xff] %v902
  %s907 = smul.u32 3, 3
  %s908 = smul.addr %s907, 8
  %s909 = scalar_lea.vmem [#allocation2], %s908
  %v910 = vld [vmem:[%s909] sm:$0xff]
  %v911 = vld [vmem:[%s909 + $0x8] sm:$0xff]
  %v912 = vld [vmem:[%s909 + $0x10] sm:$0xff]
  %913 = vmatprep.subr.mxu0 %v382
  %914 = vmatpush1.msra.mxu0 %v381
  %915 = vmatprep.subr.mxu0 %v379
  %916 = vmatpush1.msra.mxu0 %v378
  %917 = vmatprep.subr.mxu0 %v376
  %918 = vmatpush1.msra.mxu0 %v375
  %919 = vmatprep.subr.mxu0 %v373
  %920 = vmatpush1.msra.mxu0 %v372
  %921 = vmatprep.subr.mxu0 %v370
  %922 = vmatpush1.msra.mxu0 %v369
  %923 = vmatprep.subr.mxu0 %v367
  %924 = vmatpush1.msra.mxu0 %v366
  %925 = vmatprep.subr.mxu0 %v364
  %926 = vmatpush1.msra.mxu0 %v363
  %927 = vmatprep.subr.mxu0 %v361
  %928 = vmatpush1.msra.mxu0 %v360
  %929 = vmatprep.subr.mxu0 %v358
  %930 = vmatpush1.msra.mxu0 %v357
  %931 = vmatprep.subr.mxu0 %v355
  %932 = vmatpush1.msra.mxu0 %v354
  %933 = vmatprep.subr.mxu0 %v352
  %934 = vmatpush1.msra.mxu0 %v351
  %935 = vmatprep.subr.mxu0 %v349
  %936 = vmatpush1.msra.mxu0 %v348
  %937 = vmatprep.subr.mxu0 %v346
  %938 = vmatpush1.msra.mxu0 %v345
  %939 = vmatprep.subr.mxu0 %v343
  %940 = vmatpush1.msra.mxu0 %v342
  %941 = vmatprep.subr.mxu0 %v340
  %942 = vmatpush1.msra.mxu0 %v339
  %943 = vmatprep.subr.mxu0 %v337
  %944 = vmatpush1.msra.mxu0 %v336
  %945 = vmatprep.subr.mxu0 0.0
  %946 = vmatpush2.msra.mxu0 0.0
  %947 = vmatprep.subr.mxu0 0.0
  %948 = vmatpush2.msra.mxu0 0.0
  %949 = vmatprep.subr.mxu0 0.0
  %950 = vmatpush2.msra.mxu0 0.0
  %951 = vmatprep.subr.mxu0 0.0
  %952 = vmatpush2.msra.mxu0 0.0
  %953 = vmatprep.subr.mxu0 0.0
  %954 = vmatpush2.msra.mxu0 0.0
  %955 = vmatprep.subr.mxu0 0.0
  %956 = vmatpush2.msra.mxu0 0.0
  %957 = vmatprep.subr.mxu0 0.0
  %958 = vmatpush2.msra.mxu0 0.0
  %959 = vmatprep.subr.mxu0 0.0
  %960 = vmatpush2.msra.mxu0 0.0
  %961 = vmatprep.subr.mxu0 0.0
  %962 = vmatpush2.msra.mxu0 0.0
  %963 = vmatprep.subr.mxu0 0.0
  %964 = vmatpush2.msra.mxu0 0.0
  %965 = vmatprep.subr.mxu0 0.0
  %966 = vmatpush2.msra.mxu0 0.0
  %967 = vmatprep.subr.mxu0 0.0
  %968 = vmatpush2.msra.mxu0 0.0
  %969 = vmatprep.subr.mxu0 0.0
  %970 = vmatpush2.msra.mxu0 0.0
  %971 = vmatprep.subr.mxu0 0.0
  %972 = vmatpush2.msra.mxu0 0.0
  %973 = vmatprep.subr.mxu0 0.0
  %974 = vmatpush2.msra.mxu0 0.0
  %975 = vmatprep.subr.mxu0 0.0
  %976 = vmatpush2.msra.mxu0 0.0
  %977 = vmatprep.mubr.f32.mxu0 0.0
  %978 = vmatmul.mubr.f32.gmra.mxu0 %v902
  %v979 = vpop.f32.mrf.mxu0
  %v980 = vadd.f32 0.0, %v979
  %v981 = vpop.f32.mrf.mxu0
  %v982 = vadd.f32 0.0, %v981
  %983 = vdwg.mxu0
  %984 = vmatprep.subr.mxu0 0.0
  %985 = vmatpush1.msra.mxu0 %v383
  %986 = vmatprep.subr.mxu0 0.0
  %987 = vmatpush1.msra.mxu0 %v380
  %988 = vmatprep.subr.mxu0 0.0
  %989 = vmatpush1.msra.mxu0 %v377
  %990 = vmatprep.subr.mxu0 0.0
  %991 = vmatpush1.msra.mxu0 %v374
  %992 = vmatprep.subr.mxu0 0.0
  %993 = vmatpush1.msra.mxu0 %v371
  %994 = vmatprep.subr.mxu0 0.0
  %995 = vmatpush1.msra.mxu0 %v368
  %996 = vmatprep.subr.mxu0 0.0
  %997 = vmatpush1.msra.mxu0 %v365
  %998 = vmatprep.subr.mxu0 0.0
  %999 = vmatpush1.msra.mxu0 %v362
  %1000 = vmatprep.subr.mxu0 0.0
  %1001 = vmatpush1.msra.mxu0 %v359
  %1002 = vmatprep.subr.mxu0 0.0
  %1003 = vmatpush1.msra.mxu0 %v356
  %1004 = vmatprep.subr.mxu0 0.0
  %1005 = vmatpush1.msra.mxu0 %v353
  %1006 = vmatprep.subr.mxu0 0.0
  %1007 = vmatpush1.msra.mxu0 %v350
  %1008 = vmatprep.subr.mxu0 0.0
  %1009 = vmatpush1.msra.mxu0 %v347
  %1010 = vmatprep.subr.mxu0 0.0
  %1011 = vmatpush1.msra.mxu0 %v344
  %1012 = vmatprep.subr.mxu0 0.0
  %1013 = vmatpush1.msra.mxu0 %v341
  %1014 = vmatprep.subr.mxu0 0.0
  %1015 = vmatpush1.msra.mxu0 %v338
  %1016 = vmatprep.subr.mxu0 0.0
  %1017 = vmatpush2.msra.mxu0 0.0
  %1018 = vmatprep.subr.mxu0 0.0
  %1019 = vmatpush2.msra.mxu0 0.0
  %1020 = vmatprep.subr.mxu0 0.0
  %1021 = vmatpush2.msra.mxu0 0.0
  %1022 = vmatprep.subr.mxu0 0.0
  %1023 = vmatpush2.msra.mxu0 0.0
  %1024 = vmatprep.subr.mxu0 0.0
  %1025 = vmatpush2.msra.mxu0 0.0
  %1026 = vmatprep.subr.mxu0 0.0
  %1027 = vmatpush2.msra.mxu0 0.0
  %1028 = vmatprep.subr.mxu0 0.0
  %1029 = vmatpush2.msra.mxu0 0.0
  %1030 = vmatprep.subr.mxu0 0.0
  %1031 = vmatpush2.msra.mxu0 0.0
  %1032 = vmatprep.subr.mxu0 0.0
  %1033 = vmatpush2.msra.mxu0 0.0
  %1034 = vmatprep.subr.mxu0 0.0
  %1035 = vmatpush2.msra.mxu0 0.0
  %1036 = vmatprep.subr.mxu0 0.0
  %1037 = vmatpush2.msra.mxu0 0.0
  %1038 = vmatprep.subr.mxu0 0.0
  %1039 = vmatpush2.msra.mxu0 0.0
  %1040 = vmatprep.subr.mxu0 0.0
  %1041 = vmatpush2.msra.mxu0 0.0
  %1042 = vmatprep.subr.mxu0 0.0
  %1043 = vmatpush2.msra.mxu0 0.0
  %1044 = vmatprep.subr.mxu0 0.0
  %1045 = vmatpush2.msra.mxu0 0.0
  %1046 = vmatprep.subr.mxu0 0.0
  %1047 = vmatpush2.msra.mxu0 0.0
  %1048 = vmatprep.mubr.f32.mxu0 0.0
  %1049 = vmatmul.mubr.f32.gmra.mxu0 %v902
  %v1050 = vpop.f32.mrf.mxu0
  %v1051 = vadd.f32 0.0, %v1050
  %v1052 = vpop.f32.mrf.mxu0
  %1053 = vdwg.mxu0
  %v1054 = vadd.f32 %v910, %v980
  %v1055 = vadd.f32 %v911, %v982
  %v1056 = vxor.u32 %v1054, 2147483648
  %v1057 = vxor.u32 %v1055, 2147483648
  %v1058 = vmul.f32 %v1056, 1.442695
  %v1059 = vpow.pop %v1058
  %v1060 = vmul.f32 %v1057, 1.442695
  %v1061 = vpow.pop %v1060
  %v1062 = vadd.f32 %v1059, 1.0
  %v1063 = vadd.f32 %v1061, 1.0
  %v1064 = vrcp.pop %v1062
  %v1065 = vmul.f32 1.0, %v1064
  %v1066 = vrcp.pop %v1063
  %v1067 = vmul.f32 1.0, %v1066
  %v1068 = vadd.f32 %v1051, %v388
  %v1069 = vmul.f32 %v1065, %v1068
  %v1070 = vadd.f32 %v912, %v1069
  %v1071 = vtanh.pop %v1070
  %v1072 = vsub.f32 1.0, %v1067
  %v1073 = vmul.f32 %v1072, %v1071
  %v1074 = vmul.f32 %v1067, %v902
  %v1075 = vadd.f32 %v1073, %v1074
  %s1076 = scalar_lea.vmem [#allocation3], 24
  %1077 = vst [vmem:[%s1076] sm:$0xff] %v1075
  %s1078 = scalar_lea.vmem [#allocation4], 32
  %1079 = vst [vmem:[%s1078] sm:$0xff] %v1075
  %s1080 = smul.u32 4, 3
  %s1081 = smul.addr %s1080, 8
  %s1082 = scalar_lea.vmem [#allocation2], %s1081
  %v1083 = vld [vmem:[%s1082] sm:$0xff]
  %v1084 = vld [vmem:[%s1082 + $0x8] sm:$0xff]
  %v1085 = vld [vmem:[%s1082 + $0x10] sm:$0xff]
  %1086 = vmatprep.subr.mxu0 %v382
  %1087 = vmatpush1.msra.mxu0 %v381
  %1088 = vmatprep.subr.mxu0 %v379
  %1089 = vmatpush1.msra.mxu0 %v378
  %1090 = vmatprep.subr.mxu0 %v376
  %1091 = vmatpush1.msra.mxu0 %v375
  %1092 = vmatprep.subr.mxu0 %v373
  %1093 = vmatpush1.msra.mxu0 %v372
  %1094 = vmatprep.subr.mxu0 %v370
  %1095 = vmatpush1.msra.mxu0 %v369
  %1096 = vmatprep.subr.mxu0 %v367
  %1097 = vmatpush1.msra.mxu0 %v366
  %1098 = vmatprep.subr.mxu0 %v364
  %1099 = vmatpush1.msra.mxu0 %v363
  %1100 = vmatprep.subr.mxu0 %v361
  %1101 = vmatpush1.msra.mxu0 %v360
  %1102 = vmatprep.subr.mxu0 %v358
  %1103 = vmatpush1.msra.mxu0 %v357
  %1104 = vmatprep.subr.mxu0 %v355
  %1105 = vmatpush1.msra.mxu0 %v354
  %1106 = vmatprep.subr.mxu0 %v352
  %1107 = vmatpush1.msra.mxu0 %v351
  %1108 = vmatprep.subr.mxu0 %v349
  %1109 = vmatpush1.msra.mxu0 %v348
  %1110 = vmatprep.subr.mxu0 %v346
  %1111 = vmatpush1.msra.mxu0 %v345
  %1112 = vmatprep.subr.mxu0 %v343
  %1113 = vmatpush1.msra.mxu0 %v342
  %1114 = vmatprep.subr.mxu0 %v340
  %1115 = vmatpush1.msra.mxu0 %v339
  %1116 = vmatprep.subr.mxu0 %v337
  %1117 = vmatpush1.msra.mxu0 %v336
  %1118 = vmatprep.subr.mxu0 0.0
  %1119 = vmatpush2.msra.mxu0 0.0
  %1120 = vmatprep.subr.mxu0 0.0
  %1121 = vmatpush2.msra.mxu0 0.0
  %1122 = vmatprep.subr.mxu0 0.0
  %1123 = vmatpush2.msra.mxu0 0.0
  %1124 = vmatprep.subr.mxu0 0.0
  %1125 = vmatpush2.msra.mxu0 0.0
  %1126 = vmatprep.subr.mxu0 0.0
  %1127 = vmatpush2.msra.mxu0 0.0
  %1128 = vmatprep.subr.mxu0 0.0
  %1129 = vmatpush2.msra.mxu0 0.0
  %1130 = vmatprep.subr.mxu0 0.0
  %1131 = vmatpush2.msra.mxu0 0.0
  %1132 = vmatprep.subr.mxu0 0.0
  %1133 = vmatpush2.msra.mxu0 0.0
  %1134 = vmatprep.subr.mxu0 0.0
  %1135 = vmatpush2.msra.mxu0 0.0
  %1136 = vmatprep.subr.mxu0 0.0
  %1137 = vmatpush2.msra.mxu0 0.0
  %1138 = vmatprep.subr.mxu0 0.0
  %1139 = vmatpush2.msra.mxu0 0.0
  %1140 = vmatprep.subr.mxu0 0.0
  %1141 = vmatpush2.msra.mxu0 0.0
  %1142 = vmatprep.subr.mxu0 0.0
  %1143 = vmatpush2.msra.mxu0 0.0
  %1144 = vmatprep.subr.mxu0 0.0
  %1145 = vmatpush2.msra.mxu0 0.0
  %1146 = vmatprep.subr.mxu0 0.0
  %1147 = vmatpush2.msra.mxu0 0.0
  %1148 = vmatprep.subr.mxu0 0.0
  %1149 = vmatpush2.msra.mxu0 0.0
  %1150 = vmatprep.mubr.f32.mxu0 0.0
  %1151 = vmatmul.mubr.f32.gmra.mxu0 %v1075
  %v1152 = vpop.f32.mrf.mxu0
  %v1153 = vadd.f32 0.0, %v1152
  %v1154 = vpop.f32.mrf.mxu0
  %v1155 = vadd.f32 0.0, %v1154
  %1156 = vdwg.mxu0
  %1157 = vmatprep.subr.mxu0 0.0
  %1158 = vmatpush1.msra.mxu0 %v383
  %1159 = vmatprep.subr.mxu0 0.0
  %1160 = vmatpush1.msra.mxu0 %v380
  %1161 = vmatprep.subr.mxu0 0.0
  %1162 = vmatpush1.msra.mxu0 %v377
  %1163 = vmatprep.subr.mxu0 0.0
  %1164 = vmatpush1.msra.mxu0 %v374
  %1165 = vmatprep.subr.mxu0 0.0
  %1166 = vmatpush1.msra.mxu0 %v371
  %1167 = vmatprep.subr.mxu0 0.0
  %1168 = vmatpush1.msra.mxu0 %v368
  %1169 = vmatprep.subr.mxu0 0.0
  %1170 = vmatpush1.msra.mxu0 %v365
  %1171 = vmatprep.subr.mxu0 0.0
  %1172 = vmatpush1.msra.mxu0 %v362
  %1173 = vmatprep.subr.mxu0 0.0
  %1174 = vmatpush1.msra.mxu0 %v359
  %1175 = vmatprep.subr.mxu0 0.0
  %1176 = vmatpush1.msra.mxu0 %v356
  %1177 = vmatprep.subr.mxu0 0.0
  %1178 = vmatpush1.msra.mxu0 %v353
  %1179 = vmatprep.subr.mxu0 0.0
  %1180 = vmatpush1.msra.mxu0 %v350
  %1181 = vmatprep.subr.mxu0 0.0
  %1182 = vmatpush1.msra.mxu0 %v347
  %1183 = vmatprep.subr.mxu0 0.0
  %1184 = vmatpush1.msra.mxu0 %v344
  %1185 = vmatprep.subr.mxu0 0.0
  %1186 = vmatpush1.msra.mxu0 %v341
  %1187 = vmatprep.subr.mxu0 0.0
  %1188 = vmatpush1.msra.mxu0 %v338
  %1189 = vmatprep.subr.mxu0 0.0
  %1190 = vmatpush2.msra.mxu0 0.0
  %1191 = vmatprep.subr.mxu0 0.0
  %1192 = vmatpush2.msra.mxu0 0.0
  %1193 = vmatprep.subr.mxu0 0.0
  %1194 = vmatpush2.msra.mxu0 0.0
  %1195 = vmatprep.subr.mxu0 0.0
  %1196 = vmatpush2.msra.mxu0 0.0
  %1197 = vmatprep.subr.mxu0 0.0
  %1198 = vmatpush2.msra.mxu0 0.0
  %1199 = vmatprep.subr.mxu0 0.0
  %1200 = vmatpush2.msra.mxu0 0.0
  %1201 = vmatprep.subr.mxu0 0.0
  %1202 = vmatpush2.msra.mxu0 0.0
  %1203 = vmatprep.subr.mxu0 0.0
  %1204 = vmatpush2.msra.mxu0 0.0
  %1205 = vmatprep.subr.mxu0 0.0
  %1206 = vmatpush2.msra.mxu0 0.0
  %1207 = vmatprep.subr.mxu0 0.0
  %1208 = vmatpush2.msra.mxu0 0.0
  %1209 = vmatprep.subr.mxu0 0.0
  %1210 = vmatpush2.msra.mxu0 0.0
  %1211 = vmatprep.subr.mxu0 0.0
  %1212 = vmatpush2.msra.mxu0 0.0
  %1213 = vmatprep.subr.mxu0 0.0
  %1214 = vmatpush2.msra.mxu0 0.0
  %1215 = vmatprep.subr.mxu0 0.0
  %1216 = vmatpush2.msra.mxu0 0.0
  %1217 = vmatprep.subr.mxu0 0.0
  %1218 = vmatpush2.msra.mxu0 0.0
  %1219 = vmatprep.subr.mxu0 0.0
  %1220 = vmatpush2.msra.mxu0 0.0
  %1221 = vmatprep.mubr.f32.mxu0 0.0
  %1222 = vmatmul.mubr.f32.gmra.mxu0 %v1075
  %v1223 = vpop.f32.mrf.mxu0
  %v1224 = vadd.f32 0.0, %v1223
  %v1225 = vpop.f32.mrf.mxu0
  %1226 = vdwg.mxu0
  %v1227 = vadd.f32 %v1083, %v1153
  %v1228 = vadd.f32 %v1084, %v1155
  %v1229 = vxor.u32 %v1227, 2147483648
  %v1230 = vxor.u32 %v1228, 2147483648
  %v1231 = vmul.f32 %v1229, 1.442695
  %v1232 = vpow.pop %v1231
  %v1233 = vmul.f32 %v1230, 1.442695
  %v1234 = vpow.pop %v1233
  %v1235 = vadd.f32 %v1232, 1.0
  %v1236 = vadd.f32 %v1234, 1.0
  %v1237 = vrcp.pop %v1235
  %v1238 = vmul.f32 1.0, %v1237
  %v1239 = vrcp.pop %v1236
  %v1240 = vmul.f32 1.0, %v1239
  %v1241 = vadd.f32 %v1224, %v388
  %v1242 = vmul.f32 %v1238, %v1241
  %v1243 = vadd.f32 %v1085, %v1242
  %v1244 = vtanh.pop %v1243
  %v1245 = vsub.f32 1.0, %v1240
  %v1246 = vmul.f32 %v1245, %v1244
  %v1247 = vmul.f32 %v1240, %v1075
  %v1248 = vadd.f32 %v1246, %v1247
  %s1249 = scalar_lea.vmem [#allocation3], 32
  %1250 = vst [vmem:[%s1249] sm:$0xff] %v1248
  %s1251 = scalar_lea.vmem [#allocation4], 24
  %1252 = vst [vmem:[%s1251] sm:$0xff] %v1248
  %s1253 = smul.u32 5, 3
  %s1254 = smul.addr %s1253, 8
  %s1255 = scalar_lea.vmem [#allocation2], %s1254
  %v1256 = vld [vmem:[%s1255] sm:$0xff]
  %v1257 = vld [vmem:[%s1255 + $0x8] sm:$0xff]
  %v1258 = vld [vmem:[%s1255 + $0x10] sm:$0xff]
  %1259 = vmatprep.subr.mxu0 %v382
  %1260 = vmatpush1.msra.mxu0 %v381
  %1261 = vmatprep.subr.mxu0 %v379
  %1262 = vmatpush1.msra.mxu0 %v378
  %1263 = vmatprep.subr.mxu0 %v376
  %1264 = vmatpush1.msra.mxu0 %v375
  %1265 = vmatprep.subr.mxu0 %v373
  %1266 = vmatpush1.msra.mxu0 %v372
  %1267 = vmatprep.subr.mxu0 %v370
  %1268 = vmatpush1.msra.mxu0 %v369
  %1269 = vmatprep.subr.mxu0 %v367
  %1270 = vmatpush1.msra.mxu0 %v366
  %1271 = vmatprep.subr.mxu0 %v364
  %1272 = vmatpush1.msra.mxu0 %v363
  %1273 = vmatprep.subr.mxu0 %v361
  %1274 = vmatpush1.msra.mxu0 %v360
  %1275 = vmatprep.subr.mxu0 %v358
  %1276 = vmatpush1.msra.mxu0 %v357
  %1277 = vmatprep.subr.mxu0 %v355
  %1278 = vmatpush1.msra.mxu0 %v354
  %1279 = vmatprep.subr.mxu0 %v352
  %1280 = vmatpush1.msra.mxu0 %v351
  %1281 = vmatprep.subr.mxu0 %v349
  %1282 = vmatpush1.msra.mxu0 %v348
  %1283 = vmatprep.subr.mxu0 %v346
  %1284 = vmatpush1.msra.mxu0 %v345
  %1285 = vmatprep.subr.mxu0 %v343
  %1286 = vmatpush1.msra.mxu0 %v342
  %1287 = vmatprep.subr.mxu0 %v340
  %1288 = vmatpush1.msra.mxu0 %v339
  %1289 = vmatprep.subr.mxu0 %v337
  %1290 = vmatpush1.msra.mxu0 %v336
  %1291 = vmatprep.subr.mxu0 0.0
  %1292 = vmatpush2.msra.mxu0 0.0
  %1293 = vmatprep.subr.mxu0 0.0
  %1294 = vmatpush2.msra.mxu0 0.0
  %1295 = vmatprep.subr.mxu0 0.0
  %1296 = vmatpush2.msra.mxu0 0.0
  %1297 = vmatprep.subr.mxu0 0.0
  %1298 = vmatpush2.msra.mxu0 0.0
  %1299 = vmatprep.subr.mxu0 0.0
  %1300 = vmatpush2.msra.mxu0 0.0
  %1301 = vmatprep.subr.mxu0 0.0
  %1302 = vmatpush2.msra.mxu0 0.0
  %1303 = vmatprep.subr.mxu0 0.0
  %1304 = vmatpush2.msra.mxu0 0.0
  %1305 = vmatprep.subr.mxu0 0.0
  %1306 = vmatpush2.msra.mxu0 0.0
  %1307 = vmatprep.subr.mxu0 0.0
  %1308 = vmatpush2.msra.mxu0 0.0
  %1309 = vmatprep.subr.mxu0 0.0
  %1310 = vmatpush2.msra.mxu0 0.0
  %1311 = vmatprep.subr.mxu0 0.0
  %1312 = vmatpush2.msra.mxu0 0.0
  %1313 = vmatprep.subr.mxu0 0.0
  %1314 = vmatpush2.msra.mxu0 0.0
  %1315 = vmatprep.subr.mxu0 0.0
  %1316 = vmatpush2.msra.mxu0 0.0
  %1317 = vmatprep.subr.mxu0 0.0
  %1318 = vmatpush2.msra.mxu0 0.0
  %1319 = vmatprep.subr.mxu0 0.0
  %1320 = vmatpush2.msra.mxu0 0.0
  %1321 = vmatprep.subr.mxu0 0.0
  %1322 = vmatpush2.msra.mxu0 0.0
  %1323 = vmatprep.mubr.f32.mxu0 0.0
  %1324 = vmatmul.mubr.f32.gmra.mxu0 %v1248
  %v1325 = vpop.f32.mrf.mxu0
  %v1326 = vadd.f32 0.0, %v1325
  %v1327 = vpop.f32.mrf.mxu0
  %v1328 = vadd.f32 0.0, %v1327
  %1329 = vdwg.mxu0
  %1330 = vmatprep.subr.mxu0 0.0
  %1331 = vmatpush1.msra.mxu0 %v383
  %1332 = vmatprep.subr.mxu0 0.0
  %1333 = vmatpush1.msra.mxu0 %v380
  %1334 = vmatprep.subr.mxu0 0.0
  %1335 = vmatpush1.msra.mxu0 %v377
  %1336 = vmatprep.subr.mxu0 0.0
  %1337 = vmatpush1.msra.mxu0 %v374
  %1338 = vmatprep.subr.mxu0 0.0
  %1339 = vmatpush1.msra.mxu0 %v371
  %1340 = vmatprep.subr.mxu0 0.0
  %1341 = vmatpush1.msra.mxu0 %v368
  %1342 = vmatprep.subr.mxu0 0.0
  %1343 = vmatpush1.msra.mxu0 %v365
  %1344 = vmatprep.subr.mxu0 0.0
  %1345 = vmatpush1.msra.mxu0 %v362
  %1346 = vmatprep.subr.mxu0 0.0
  %1347 = vmatpush1.msra.mxu0 %v359
  %1348 = vmatprep.subr.mxu0 0.0
  %1349 = vmatpush1.msra.mxu0 %v356
  %1350 = vmatprep.subr.mxu0 0.0
  %1351 = vmatpush1.msra.mxu0 %v353
  %1352 = vmatprep.subr.mxu0 0.0
  %1353 = vmatpush1.msra.mxu0 %v350
  %1354 = vmatprep.subr.mxu0 0.0
  %1355 = vmatpush1.msra.mxu0 %v347
  %1356 = vmatprep.subr.mxu0 0.0
  %1357 = vmatpush1.msra.mxu0 %v344
  %1358 = vmatprep.subr.mxu0 0.0
  %1359 = vmatpush1.msra.mxu0 %v341
  %1360 = vmatprep.subr.mxu0 0.0
  %1361 = vmatpush1.msra.mxu0 %v338
  %1362 = vmatprep.subr.mxu0 0.0
  %1363 = vmatpush2.msra.mxu0 0.0
  %1364 = vmatprep.subr.mxu0 0.0
  %1365 = vmatpush2.msra.mxu0 0.0
  %1366 = vmatprep.subr.mxu0 0.0
  %1367 = vmatpush2.msra.mxu0 0.0
  %1368 = vmatprep.subr.mxu0 0.0
  %1369 = vmatpush2.msra.mxu0 0.0
  %1370 = vmatprep.subr.mxu0 0.0
  %1371 = vmatpush2.msra.mxu0 0.0
  %1372 = vmatprep.subr.mxu0 0.0
  %1373 = vmatpush2.msra.mxu0 0.0
  %1374 = vmatprep.subr.mxu0 0.0
  %1375 = vmatpush2.msra.mxu0 0.0
  %1376 = vmatprep.subr.mxu0 0.0
  %1377 = vmatpush2.msra.mxu0 0.0
  %1378 = vmatprep.subr.mxu0 0.0
  %1379 = vmatpush2.msra.mxu0 0.0
  %1380 = vmatprep.subr.mxu0 0.0
  %1381 = vmatpush2.msra.mxu0 0.0
  %1382 = vmatprep.subr.mxu0 0.0
  %1383 = vmatpush2.msra.mxu0 0.0
  %1384 = vmatprep.subr.mxu0 0.0
  %1385 = vmatpush2.msra.mxu0 0.0
  %1386 = vmatprep.subr.mxu0 0.0
  %1387 = vmatpush2.msra.mxu0 0.0
  %1388 = vmatprep.subr.mxu0 0.0
  %1389 = vmatpush2.msra.mxu0 0.0
  %1390 = vmatprep.subr.mxu0 0.0
  %1391 = vmatpush2.msra.mxu0 0.0
  %1392 = vmatprep.subr.mxu0 0.0
  %1393 = vmatpush2.msra.mxu0 0.0
  %1394 = vmatprep.mubr.f32.mxu0 0.0
  %1395 = vmatmul.mubr.f32.gmra.mxu0 %v1248
  %v1396 = vpop.f32.mrf.mxu0
  %v1397 = vadd.f32 0.0, %v1396
  %v1398 = vpop.f32.mrf.mxu0
  %1399 = vdwg.mxu0
  %v1400 = vadd.f32 %v1256, %v1326
  %v1401 = vadd.f32 %v1257, %v1328
  %v1402 = vxor.u32 %v1400, 2147483648
  %v1403 = vxor.u32 %v1401, 2147483648
  %v1404 = vmul.f32 %v1402, 1.442695
  %v1405 = vpow.pop %v1404
  %v1406 = vmul.f32 %v1403, 1.442695
  %v1407 = vpow.pop %v1406
  %v1408 = vadd.f32 %v1405, 1.0
  %v1409 = vadd.f32 %v1407, 1.0
  %v1410 = vrcp.pop %v1408
  %v1411 = vmul.f32 1.0, %v1410
  %v1412 = vrcp.pop %v1409
  %v1413 = vmul.f32 1.0, %v1412
  %v1414 = vadd.f32 %v1397, %v388
  %v1415 = vmul.f32 %v1411, %v1414
  %v1416 = vadd.f32 %v1258, %v1415
  %v1417 = vtanh.pop %v1416
  %v1418 = vsub.f32 1.0, %v1413
  %v1419 = vmul.f32 %v1418, %v1417
  %v1420 = vmul.f32 %v1413, %v1248
  %v1421 = vadd.f32 %v1419, %v1420
  %s1422 = scalar_lea.vmem [#allocation3], 40
  %1423 = vst [vmem:[%s1422] sm:$0xff] %v1421
  %s1424 = scalar_lea.vmem [#allocation4], 16
  %1425 = vst [vmem:[%s1424] sm:$0xff] %v1421
  %s1426 = smul.u32 6, 3
  %s1427 = smul.addr %s1426, 8
  %s1428 = scalar_lea.vmem [#allocation2], %s1427
  %v1429 = vld [vmem:[%s1428] sm:$0xff]
  %v1430 = vld [vmem:[%s1428 + $0x8] sm:$0xff]
  %v1431 = vld [vmem:[%s1428 + $0x10] sm:$0xff]
  %1432 = vmatprep.subr.mxu0 %v382
  %1433 = vmatpush1.msra.mxu0 %v381
  %1434 = vmatprep.subr.mxu0 %v379
  %1435 = vmatpush1.msra.mxu0 %v378
  %1436 = vmatprep.subr.mxu0 %v376
  %1437 = vmatpush1.msra.mxu0 %v375
  %1438 = vmatprep.subr.mxu0 %v373
  %1439 = vmatpush1.msra.mxu0 %v372
  %1440 = vmatprep.subr.mxu0 %v370
  %1441 = vmatpush1.msra.mxu0 %v369
  %1442 = vmatprep.subr.mxu0 %v367
  %1443 = vmatpush1.msra.mxu0 %v366
  %1444 = vmatprep.subr.mxu0 %v364
  %1445 = vmatpush1.msra.mxu0 %v363
  %1446 = vmatprep.subr.mxu0 %v361
  %1447 = vmatpush1.msra.mxu0 %v360
  %1448 = vmatprep.subr.mxu0 %v358
  %1449 = vmatpush1.msra.mxu0 %v357
  %1450 = vmatprep.subr.mxu0 %v355
  %1451 = vmatpush1.msra.mxu0 %v354
  %1452 = vmatprep.subr.mxu0 %v352
  %1453 = vmatpush1.msra.mxu0 %v351
  %1454 = vmatprep.subr.mxu0 %v349
  %1455 = vmatpush1.msra.mxu0 %v348
  %1456 = vmatprep.subr.mxu0 %v346
  %1457 = vmatpush1.msra.mxu0 %v345
  %1458 = vmatprep.subr.mxu0 %v343
  %1459 = vmatpush1.msra.mxu0 %v342
  %1460 = vmatprep.subr.mxu0 %v340
  %1461 = vmatpush1.msra.mxu0 %v339
  %1462 = vmatprep.subr.mxu0 %v337
  %1463 = vmatpush1.msra.mxu0 %v336
  %1464 = vmatprep.subr.mxu0 0.0
  %1465 = vmatpush2.msra.mxu0 0.0
  %1466 = vmatprep.subr.mxu0 0.0
  %1467 = vmatpush2.msra.mxu0 0.0
  %1468 = vmatprep.subr.mxu0 0.0
  %1469 = vmatpush2.msra.mxu0 0.0
  %1470 = vmatprep.subr.mxu0 0.0
  %1471 = vmatpush2.msra.mxu0 0.0
  %1472 = vmatprep.subr.mxu0 0.0
  %1473 = vmatpush2.msra.mxu0 0.0
  %1474 = vmatprep.subr.mxu0 0.0
  %1475 = vmatpush2.msra.mxu0 0.0
  %1476 = vmatprep.subr.mxu0 0.0
  %1477 = vmatpush2.msra.mxu0 0.0
  %1478 = vmatprep.subr.mxu0 0.0
  %1479 = vmatpush2.msra.mxu0 0.0
  %1480 = vmatprep.subr.mxu0 0.0
  %1481 = vmatpush2.msra.mxu0 0.0
  %1482 = vmatprep.subr.mxu0 0.0
  %1483 = vmatpush2.msra.mxu0 0.0
  %1484 = vmatprep.subr.mxu0 0.0
  %1485 = vmatpush2.msra.mxu0 0.0
  %1486 = vmatprep.subr.mxu0 0.0
  %1487 = vmatpush2.msra.mxu0 0.0
  %1488 = vmatprep.subr.mxu0 0.0
  %1489 = vmatpush2.msra.mxu0 0.0
  %1490 = vmatprep.subr.mxu0 0.0
  %1491 = vmatpush2.msra.mxu0 0.0
  %1492 = vmatprep.subr.mxu0 0.0
  %1493 = vmatpush2.msra.mxu0 0.0
  %1494 = vmatprep.subr.mxu0 0.0
  %1495 = vmatpush2.msra.mxu0 0.0
  %1496 = vmatprep.mubr.f32.mxu0 0.0
  %1497 = vmatmul.mubr.f32.gmra.mxu0 %v1421
  %v1498 = vpop.f32.mrf.mxu0
  %v1499 = vadd.f32 0.0, %v1498
  %v1500 = vpop.f32.mrf.mxu0
  %v1501 = vadd.f32 0.0, %v1500
  %1502 = vdwg.mxu0
  %1503 = vmatprep.subr.mxu0 0.0
  %1504 = vmatpush1.msra.mxu0 %v383
  %1505 = vmatprep.subr.mxu0 0.0
  %1506 = vmatpush1.msra.mxu0 %v380
  %1507 = vmatprep.subr.mxu0 0.0
  %1508 = vmatpush1.msra.mxu0 %v377
  %1509 = vmatprep.subr.mxu0 0.0
  %1510 = vmatpush1.msra.mxu0 %v374
  %1511 = vmatprep.subr.mxu0 0.0
  %1512 = vmatpush1.msra.mxu0 %v371
  %1513 = vmatprep.subr.mxu0 0.0
  %1514 = vmatpush1.msra.mxu0 %v368
  %1515 = vmatprep.subr.mxu0 0.0
  %1516 = vmatpush1.msra.mxu0 %v365
  %1517 = vmatprep.subr.mxu0 0.0
  %1518 = vmatpush1.msra.mxu0 %v362
  %1519 = vmatprep.subr.mxu0 0.0
  %1520 = vmatpush1.msra.mxu0 %v359
  %1521 = vmatprep.subr.mxu0 0.0
  %1522 = vmatpush1.msra.mxu0 %v356
  %1523 = vmatprep.subr.mxu0 0.0
  %1524 = vmatpush1.msra.mxu0 %v353
  %1525 = vmatprep.subr.mxu0 0.0
  %1526 = vmatpush1.msra.mxu0 %v350
  %1527 = vmatprep.subr.mxu0 0.0
  %1528 = vmatpush1.msra.mxu0 %v347
  %1529 = vmatprep.subr.mxu0 0.0
  %1530 = vmatpush1.msra.mxu0 %v344
  %1531 = vmatprep.subr.mxu0 0.0
  %1532 = vmatpush1.msra.mxu0 %v341
  %1533 = vmatprep.subr.mxu0 0.0
  %1534 = vmatpush1.msra.mxu0 %v338
  %1535 = vmatprep.subr.mxu0 0.0
  %1536 = vmatpush2.msra.mxu0 0.0
  %1537 = vmatprep.subr.mxu0 0.0
  %1538 = vmatpush2.msra.mxu0 0.0
  %1539 = vmatprep.subr.mxu0 0.0
  %1540 = vmatpush2.msra.mxu0 0.0
  %1541 = vmatprep.subr.mxu0 0.0
  %1542 = vmatpush2.msra.mxu0 0.0
  %1543 = vmatprep.subr.mxu0 0.0
  %1544 = vmatpush2.msra.mxu0 0.0
  %1545 = vmatprep.subr.mxu0 0.0
  %1546 = vmatpush2.msra.mxu0 0.0
  %1547 = vmatprep.subr.mxu0 0.0
  %1548 = vmatpush2.msra.mxu0 0.0
  %1549 = vmatprep.subr.mxu0 0.0
  %1550 = vmatpush2.msra.mxu0 0.0
  %1551 = vmatprep.subr.mxu0 0.0
  %1552 = vmatpush2.msra.mxu0 0.0
  %1553 = vmatprep.subr.mxu0 0.0
  %1554 = vmatpush2.msra.mxu0 0.0
  %1555 = vmatprep.subr.mxu0 0.0
  %1556 = vmatpush2.msra.mxu0 0.0
  %1557 = vmatprep.subr.mxu0 0.0
  %1558 = vmatpush2.msra.mxu0 0.0
  %1559 = vmatprep.subr.mxu0 0.0
  %1560 = vmatpush2.msra.mxu0 0.0
  %1561 = vmatprep.subr.mxu0 0.0
  %1562 = vmatpush2.msra.mxu0 0.0
  %1563 = vmatprep.subr.mxu0 0.0
  %1564 = vmatpush2.msra.mxu0 0.0
  %1565 = vmatprep.subr.mxu0 0.0
  %1566 = vmatpush2.msra.mxu0 0.0
  %1567 = vmatprep.mubr.f32.mxu0 0.0
  %1568 = vmatmul.mubr.f32.gmra.mxu0 %v1421
  %v1569 = vpop.f32.mrf.mxu0
  %v1570 = vadd.f32 0.0, %v1569
  %v1571 = vpop.f32.mrf.mxu0
  %1572 = vdwg.mxu0
  %v1573 = vadd.f32 %v1429, %v1499
  %v1574 = vadd.f32 %v1430, %v1501
  %v1575 = vxor.u32 %v1573, 2147483648
  %v1576 = vxor.u32 %v1574, 2147483648
  %v1577 = vmul.f32 %v1575, 1.442695
  %v1578 = vpow.pop %v1577
  %v1579 = vmul.f32 %v1576, 1.442695
  %v1580 = vpow.pop %v1579
  %v1581 = vadd.f32 %v1578, 1.0
  %v1582 = vadd.f32 %v1580, 1.0
  %v1583 = vrcp.pop %v1581
  %v1584 = vmul.f32 1.0, %v1583
  %v1585 = vrcp.pop %v1582
  %v1586 = vmul.f32 1.0, %v1585
  %v1587 = vadd.f32 %v1570, %v388
  %v1588 = vmul.f32 %v1584, %v1587
  %v1589 = vadd.f32 %v1431, %v1588
  %v1590 = vtanh.pop %v1589
  %v1591 = vsub.f32 1.0, %v1586
  %v1592 = vmul.f32 %v1591, %v1590
  %v1593 = vmul.f32 %v1586, %v1421
  %v1594 = vadd.f32 %v1592, %v1593
  %s1595 = scalar_lea.vmem [#allocation3], 48
  %1596 = vst [vmem:[%s1595] sm:$0xff] %v1594
  %s1597 = scalar_lea.vmem [#allocation4], 8
  %1598 = vst [vmem:[%s1597] sm:$0xff] %v1594
  %s1599 = smul.u32 7, 3
  %s1600 = smul.addr %s1599, 8
  %s1601 = scalar_lea.vmem [#allocation2], %s1600
  %v1602 = vld [vmem:[%s1601] sm:$0xff]
  %v1603 = vld [vmem:[%s1601 + $0x8] sm:$0xff]
  %v1604 = vld [vmem:[%s1601 + $0x10] sm:$0xff]
  %1605 = vmatprep.subr.mxu0 %v382
  %1606 = vmatpush1.msra.mxu0 %v381
  %1607 = vmatprep.subr.mxu0 %v379
  %1608 = vmatpush1.msra.mxu0 %v378
  %1609 = vmatprep.subr.mxu0 %v376
  %1610 = vmatpush1.msra.mxu0 %v375
  %1611 = vmatprep.subr.mxu0 %v373
  %1612 = vmatpush1.msra.mxu0 %v372
  %1613 = vmatprep.subr.mxu0 %v370
  %1614 = vmatpush1.msra.mxu0 %v369
  %1615 = vmatprep.subr.mxu0 %v367
  %1616 = vmatpush1.msra.mxu0 %v366
  %1617 = vmatprep.subr.mxu0 %v364
  %1618 = vmatpush1.msra.mxu0 %v363
  %1619 = vmatprep.subr.mxu0 %v361
  %1620 = vmatpush1.msra.mxu0 %v360
  %1621 = vmatprep.subr.mxu0 %v358
  %1622 = vmatpush1.msra.mxu0 %v357
  %1623 = vmatprep.subr.mxu0 %v355
  %1624 = vmatpush1.msra.mxu0 %v354
  %1625 = vmatprep.subr.mxu0 %v352
  %1626 = vmatpush1.msra.mxu0 %v351
  %1627 = vmatprep.subr.mxu0 %v349
  %1628 = vmatpush1.msra.mxu0 %v348
  %1629 = vmatprep.subr.mxu0 %v346
  %1630 = vmatpush1.msra.mxu0 %v345
  %1631 = vmatprep.subr.mxu0 %v343
  %1632 = vmatpush1.msra.mxu0 %v342
  %1633 = vmatprep.subr.mxu0 %v340
  %1634 = vmatpush1.msra.mxu0 %v339
  %1635 = vmatprep.subr.mxu0 %v337
  %1636 = vmatpush1.msra.mxu0 %v336
  %1637 = vmatprep.subr.mxu0 0.0
  %1638 = vmatpush2.msra.mxu0 0.0
  %1639 = vmatprep.subr.mxu0 0.0
  %1640 = vmatpush2.msra.mxu0 0.0
  %1641 = vmatprep.subr.mxu0 0.0
  %1642 = vmatpush2.msra.mxu0 0.0
  %1643 = vmatprep.subr.mxu0 0.0
  %1644 = vmatpush2.msra.mxu0 0.0
  %1645 = vmatprep.subr.mxu0 0.0
  %1646 = vmatpush2.msra.mxu0 0.0
  %1647 = vmatprep.subr.mxu0 0.0
  %1648 = vmatpush2.msra.mxu0 0.0
  %1649 = vmatprep.subr.mxu0 0.0
  %1650 = vmatpush2.msra.mxu0 0.0
  %1651 = vmatprep.subr.mxu0 0.0
  %1652 = vmatpush2.msra.mxu0 0.0
  %1653 = vmatprep.subr.mxu0 0.0
  %1654 = vmatpush2.msra.mxu0 0.0
  %1655 = vmatprep.subr.mxu0 0.0
  %1656 = vmatpush2.msra.mxu0 0.0
  %1657 = vmatprep.subr.mxu0 0.0
  %1658 = vmatpush2.msra.mxu0 0.0
  %1659 = vmatprep.subr.mxu0 0.0
  %1660 = vmatpush2.msra.mxu0 0.0
  %1661 = vmatprep.subr.mxu0 0.0
  %1662 = vmatpush2.msra.mxu0 0.0
  %1663 = vmatprep.subr.mxu0 0.0
  %1664 = vmatpush2.msra.mxu0 0.0
  %1665 = vmatprep.subr.mxu0 0.0
  %1666 = vmatpush2.msra.mxu0 0.0
  %1667 = vmatprep.subr.mxu0 0.0
  %1668 = vmatpush2.msra.mxu0 0.0
  %1669 = vmatprep.mubr.f32.mxu0 0.0
  %1670 = vmatmul.mubr.f32.gmra.mxu0 %v1594
  %v1671 = vpop.f32.mrf.mxu0
  %v1672 = vadd.f32 0.0, %v1671
  %v1673 = vpop.f32.mrf.mxu0
  %v1674 = vadd.f32 0.0, %v1673
  %1675 = vdwg.mxu0
  %1676 = vmatprep.subr.mxu0 0.0
  %1677 = vmatpush1.msra.mxu0 %v383
  %1678 = vmatprep.subr.mxu0 0.0
  %1679 = vmatpush1.msra.mxu0 %v380
  %1680 = vmatprep.subr.mxu0 0.0
  %1681 = vmatpush1.msra.mxu0 %v377
  %1682 = vmatprep.subr.mxu0 0.0
  %1683 = vmatpush1.msra.mxu0 %v374
  %1684 = vmatprep.subr.mxu0 0.0
  %1685 = vmatpush1.msra.mxu0 %v371
  %1686 = vmatprep.subr.mxu0 0.0
  %1687 = vmatpush1.msra.mxu0 %v368
  %1688 = vmatprep.subr.mxu0 0.0
  %1689 = vmatpush1.msra.mxu0 %v365
  %1690 = vmatprep.subr.mxu0 0.0
  %1691 = vmatpush1.msra.mxu0 %v362
  %1692 = vmatprep.subr.mxu0 0.0
  %1693 = vmatpush1.msra.mxu0 %v359
  %1694 = vmatprep.subr.mxu0 0.0
  %1695 = vmatpush1.msra.mxu0 %v356
  %1696 = vmatprep.subr.mxu0 0.0
  %1697 = vmatpush1.msra.mxu0 %v353
  %1698 = vmatprep.subr.mxu0 0.0
  %1699 = vmatpush1.msra.mxu0 %v350
  %1700 = vmatprep.subr.mxu0 0.0
  %1701 = vmatpush1.msra.mxu0 %v347
  %1702 = vmatprep.subr.mxu0 0.0
  %1703 = vmatpush1.msra.mxu0 %v344
  %1704 = vmatprep.subr.mxu0 0.0
  %1705 = vmatpush1.msra.mxu0 %v341
  %1706 = vmatprep.subr.mxu0 0.0
  %1707 = vmatpush1.msra.mxu0 %v338
  %1708 = vmatprep.subr.mxu0 0.0
  %1709 = vmatpush2.msra.mxu0 0.0
  %1710 = vmatprep.subr.mxu0 0.0
  %1711 = vmatpush2.msra.mxu0 0.0
  %1712 = vmatprep.subr.mxu0 0.0
  %1713 = vmatpush2.msra.mxu0 0.0
  %1714 = vmatprep.subr.mxu0 0.0
  %1715 = vmatpush2.msra.mxu0 0.0
  %1716 = vmatprep.subr.mxu0 0.0
  %1717 = vmatpush2.msra.mxu0 0.0
  %1718 = vmatprep.subr.mxu0 0.0
  %1719 = vmatpush2.msra.mxu0 0.0
  %1720 = vmatprep.subr.mxu0 0.0
  %1721 = vmatpush2.msra.mxu0 0.0
  %1722 = vmatprep.subr.mxu0 0.0
  %1723 = vmatpush2.msra.mxu0 0.0
  %1724 = vmatprep.subr.mxu0 0.0
  %1725 = vmatpush2.msra.mxu0 0.0
  %1726 = vmatprep.subr.mxu0 0.0
  %1727 = vmatpush2.msra.mxu0 0.0
  %1728 = vmatprep.subr.mxu0 0.0
  %1729 = vmatpush2.msra.mxu0 0.0
  %1730 = vmatprep.subr.mxu0 0.0
  %1731 = vmatpush2.msra.mxu0 0.0
  %1732 = vmatprep.subr.mxu0 0.0
  %1733 = vmatpush2.msra.mxu0 0.0
  %1734 = vmatprep.subr.mxu0 0.0
  %1735 = vmatpush2.msra.mxu0 0.0
  %1736 = vmatprep.subr.mxu0 0.0
  %1737 = vmatpush2.msra.mxu0 0.0
  %1738 = vmatprep.subr.mxu0 0.0
  %1739 = vmatpush2.msra.mxu0 0.0
  %1740 = vmatprep.mubr.f32.mxu0 0.0
  %1741 = vmatmul.mubr.f32.gmra.mxu0 %v1594
  %v1742 = vpop.f32.mrf.mxu0
  %v1743 = vadd.f32 0.0, %v1742
  %v1744 = vpop.f32.mrf.mxu0
  %1745 = vdwg.mxu0
  %v1746 = vadd.f32 %v1602, %v1672
  %v1747 = vadd.f32 %v1603, %v1674
  %v1748 = vxor.u32 %v1746, 2147483648
  %v1749 = vxor.u32 %v1747, 2147483648
  %v1750 = vmul.f32 %v1748, 1.442695
  %v1751 = vpow.pop %v1750
  %v1752 = vmul.f32 %v1749, 1.442695
  %v1753 = vpow.pop %v1752
  %v1754 = vadd.f32 %v1751, 1.0
  %v1755 = vadd.f32 %v1753, 1.0
  %v1756 = vrcp.pop %v1754
  %v1757 = vmul.f32 1.0, %v1756
  %v1758 = vrcp.pop %v1755
  %v1759 = vmul.f32 1.0, %v1758
  %v1760 = vadd.f32 %v1743, %v388
  %v1761 = vmul.f32 %v1757, %v1760
  %v1762 = vadd.f32 %v1604, %v1761
  %v1763 = vtanh.pop %v1762
  %v1764 = vsub.f32 1.0, %v1759
  %v1765 = vmul.f32 %v1764, %v1763
  %v1766 = vmul.f32 %v1759, %v1594
  %v1767 = vadd.f32 %v1765, %v1766
  %s1768 = scalar_lea.vmem [#allocation3], 56
  %1769 = vst [vmem:[%s1768] sm:$0xff] %v1767
  %1770 = vst [vmem:[#allocation4] sm:$0xff] %v1767
  %v1771 = vld [vmem:[#allocation3] sm:$0xff]
  %v1772 = vld [vmem:[#allocation3 + $0x8] sm:$0xff]
  %v1773 = vld [vmem:[#allocation3 + $0x10] sm:$0xff]
  %v1774 = vld [vmem:[#allocation3 + $0x18] sm:$0xff]
  %v1775 = vld [vmem:[#allocation3 + $0x20] sm:$0xff]
  %v1776 = vld [vmem:[#allocation3 + $0x28] sm:$0xff]
  %v1777 = vld [vmem:[#allocation3 + $0x30] sm:$0xff]
  %v1778 = vld [vmem:[#allocation3 + $0x38] sm:$0xff]
  %vm1779 = vcmp.ge.f32.partialorder %v1771, 0.0
  %vm1780 = vcmp.ge.f32.partialorder %v1772, 0.0
  %vm1781 = vcmp.ge.f32.partialorder %v1773, 0.0
  %vm1782 = vcmp.ge.f32.partialorder %v1774, 0.0
  %vm1783 = vcmp.ge.f32.partialorder %v1775, 0.0
  %vm1784 = vcmp.ge.f32.partialorder %v1776, 0.0
  %vm1785 = vcmp.ge.f32.partialorder %v1777, 0.0
  %vm1786 = vcmp.ge.f32.partialorder %v1778, 0.0
  %v1787 = vmul.f32 %v1771, 0.01
  %v1788 = vmul.f32 %v1772, 0.01
  %v1789 = vmul.f32 %v1773, 0.01
  %v1790 = vmul.f32 %v1774, 0.01
  %v1791 = vmul.f32 %v1775, 0.01
  %v1792 = vmul.f32 %v1776, 0.01
  %v1793 = vmul.f32 %v1777, 0.01
  %v1794 = vmul.f32 %v1778, 0.01
  %v1795 = vsel %vm1779, %v1771, %v1787
  %v1796 = vsel %vm1780, %v1772, %v1788
  %v1797 = vsel %vm1781, %v1773, %v1789
  %v1798 = vsel %vm1782, %v1774, %v1790
  %v1799 = vsel %vm1783, %v1775, %v1791
  %v1800 = vsel %vm1784, %v1776, %v1792
  %v1801 = vsel %vm1785, %v1777, %v1793
  %v1802 = vsel %vm1786, %v1778, %v1794
  %v1803 = vld [vmem:[#allocation4] sm:$0xff]
  %v1804 = vld [vmem:[#allocation4 + $0x8] sm:$0xff]
  %v1805 = vld [vmem:[#allocation4 + $0x10] sm:$0xff]
  %v1806 = vld [vmem:[#allocation4 + $0x18] sm:$0xff]
  %v1807 = vld [vmem:[#allocation4 + $0x20] sm:$0xff]
  %v1808 = vld [vmem:[#allocation4 + $0x28] sm:$0xff]
  %v1809 = vld [vmem:[#allocation4 + $0x30] sm:$0xff]
  %v1810 = vld [vmem:[#allocation4 + $0x38] sm:$0xff]
  %vm1811 = vcmp.ge.f32.partialorder %v1803, 0.0
  %vm1812 = vcmp.ge.f32.partialorder %v1804, 0.0
  %vm1813 = vcmp.ge.f32.partialorder %v1805, 0.0
  %vm1814 = vcmp.ge.f32.partialorder %v1806, 0.0
  %vm1815 = vcmp.ge.f32.partialorder %v1807, 0.0
  %vm1816 = vcmp.ge.f32.partialorder %v1808, 0.0
  %vm1817 = vcmp.ge.f32.partialorder %v1809, 0.0
  %vm1818 = vcmp.ge.f32.partialorder %v1810, 0.0
  %v1819 = vmul.f32 %v1803, 0.01
  %v1820 = vmul.f32 %v1804, 0.01
  %v1821 = vmul.f32 %v1805, 0.01
  %v1822 = vmul.f32 %v1806, 0.01
  %v1823 = vmul.f32 %v1807, 0.01
  %v1824 = vmul.f32 %v1808, 0.01
  %v1825 = vmul.f32 %v1809, 0.01
  %v1826 = vmul.f32 %v1810, 0.01
  %v1827 = vsel %vm1811, %v1803, %v1819
  %v1828 = vsel %vm1812, %v1804, %v1820
  %v1829 = vsel %vm1813, %v1805, %v1821
  %v1830 = vsel %vm1814, %v1806, %v1822
  %v1831 = vsel %vm1815, %v1807, %v1823
  %v1832 = vsel %vm1816, %v1808, %v1824
  %v1833 = vsel %vm1817, %v1809, %v1825
  %v1834 = vsel %vm1818, %v1810, %v1826
  %v1835 = vld [vmem:[%s3] sm:$0xff]
  %v1836 = vld [vmem:[%s3 + $0x8] sm:$0xff]
  %v1837 = vld [vmem:[%s3 + $0x10] sm:$0xff]
  %v1838 = vld [vmem:[%s3 + $0x18] sm:$0xff]
  %v1839 = vld [vmem:[%s3 + $0x20] sm:$0xff]
  %v1840 = vld [vmem:[%s3 + $0x28] sm:$0xff]
  %v1841 = vld [vmem:[%s3 + $0x30] sm:$0xff]
  %v1842 = vld [vmem:[%s3 + $0x38] sm:$0xff]
  %v1843 = vld [vmem:[%s3 + $0x40] sm:$0xff]
  %v1844 = vld [vmem:[%s3 + $0x48] sm:$0xff]
  %v1845 = vld [vmem:[%s3 + $0x50] sm:$0xff]
  %v1846 = vld [vmem:[%s3 + $0x58] sm:$0xff]
  %v1847 = vld [vmem:[%s3 + $0x60] sm:$0xff]
  %v1848 = vld [vmem:[%s3 + $0x68] sm:$0xff]
  %v1849 = vld [vmem:[%s3 + $0x70] sm:$0xff]
  %v1850 = vld [vmem:[%s3 + $0x78] sm:$0xff]
  %v1851 = vld [vmem:[%s3 + $0x80] sm:$0xff]
  %v1852 = vld [vmem:[%s3 + $0x88] sm:$0xff]
  %v1853 = vld [vmem:[%s3 + $0x90] sm:$0xff]
  %v1854 = vld [vmem:[%s3 + $0x98] sm:$0xff]
  %v1855 = vld [vmem:[%s3 + $0xa0] sm:$0xff]
  %v1856 = vld [vmem:[%s3 + $0xa8] sm:$0xff]
  %v1857 = vld [vmem:[%s3 + $0xb0] sm:$0xff]
  %v1858 = vld [vmem:[%s3 + $0xb8] sm:$0xff]
  %v1859 = vld [vmem:[%s3 + $0xc0] sm:$0xff]
  %v1860 = vld [vmem:[%s3 + $0xc8] sm:$0xff]
  %v1861 = vld [vmem:[%s3 + $0xd0] sm:$0xff]
  %v1862 = vld [vmem:[%s3 + $0xd8] sm:$0xff]
  %v1863 = vld [vmem:[%s3 + $0xe0] sm:$0xff]
  %v1864 = vld [vmem:[%s3 + $0xe8] sm:$0xff]
  %v1865 = vld [vmem:[%s3 + $0xf0] sm:$0xff]
  %v1866 = vld [vmem:[%s3 + $0xf8] sm:$0xff]
  %1867 = vmatprep.subr.mxu0 0.0
  %1868 = vmatpush1.msra.mxu0 %v1866
  %1869 = vmatprep.subr.mxu0 0.0
  %1870 = vmatpush1.msra.mxu0 %v1865
  %1871 = vmatprep.subr.mxu0 0.0
  %1872 = vmatpush1.msra.mxu0 %v1864
  %1873 = vmatprep.subr.mxu0 0.0
  %1874 = vmatpush1.msra.mxu0 %v1863
  %1875 = vmatprep.subr.mxu0 0.0
  %1876 = vmatpush1.msra.mxu0 %v1862
  %1877 = vmatprep.subr.mxu0 0.0
  %1878 = vmatpush1.msra.mxu0 %v1861
  %1879 = vmatprep.subr.mxu0 0.0
  %1880 = vmatpush1.msra.mxu0 %v1860
  %1881 = vmatprep.subr.mxu0 0.0
  %1882 = vmatpush1.msra.mxu0 %v1859
  %1883 = vmatprep.subr.mxu0 0.0
  %1884 = vmatpush1.msra.mxu0 %v1858
  %1885 = vmatprep.subr.mxu0 0.0
  %1886 = vmatpush1.msra.mxu0 %v1857
  %1887 = vmatprep.subr.mxu0 0.0
  %1888 = vmatpush1.msra.mxu0 %v1856
  %1889 = vmatprep.subr.mxu0 0.0
  %1890 = vmatpush1.msra.mxu0 %v1855
  %1891 = vmatprep.subr.mxu0 0.0
  %1892 = vmatpush1.msra.mxu0 %v1854
  %1893 = vmatprep.subr.mxu0 0.0
  %1894 = vmatpush1.msra.mxu0 %v1853
  %1895 = vmatprep.subr.mxu0 0.0
  %1896 = vmatpush1.msra.mxu0 %v1852
  %1897 = vmatprep.subr.mxu0 0.0
  %1898 = vmatpush1.msra.mxu0 %v1851
  %1899 = vmatprep.subr.mxu0 0.0
  %1900 = vmatpush2.msra.mxu0 0.0
  %1901 = vmatprep.subr.mxu0 0.0
  %1902 = vmatpush2.msra.mxu0 0.0
  %1903 = vmatprep.subr.mxu0 0.0
  %1904 = vmatpush2.msra.mxu0 0.0
  %1905 = vmatprep.subr.mxu0 0.0
  %1906 = vmatpush2.msra.mxu0 0.0
  %1907 = vmatprep.subr.mxu0 0.0
  %1908 = vmatpush2.msra.mxu0 0.0
  %1909 = vmatprep.subr.mxu0 0.0
  %1910 = vmatpush2.msra.mxu0 0.0
  %1911 = vmatprep.subr.mxu0 0.0
  %1912 = vmatpush2.msra.mxu0 0.0
  %1913 = vmatprep.subr.mxu0 0.0
  %1914 = vmatpush2.msra.mxu0 0.0
  %1915 = vmatprep.subr.mxu0 0.0
  %1916 = vmatpush2.msra.mxu0 0.0
  %1917 = vmatprep.subr.mxu0 0.0
  %1918 = vmatpush2.msra.mxu0 0.0
  %1919 = vmatprep.subr.mxu0 0.0
  %1920 = vmatpush2.msra.mxu0 0.0
  %1921 = vmatprep.subr.mxu0 0.0
  %1922 = vmatpush2.msra.mxu0 0.0
  %1923 = vmatprep.subr.mxu0 0.0
  %1924 = vmatpush2.msra.mxu0 0.0
  %1925 = vmatprep.subr.mxu0 0.0
  %1926 = vmatpush2.msra.mxu0 0.0
  %1927 = vmatprep.subr.mxu0 0.0
  %1928 = vmatpush2.msra.mxu0 0.0
  %1929 = vmatprep.subr.mxu0 0.0
  %1930 = vmatpush2.msra.mxu0 0.0
  %1931 = vmatprep.mubr.f32.mxu0 0.0
  %1932 = vmatmul.mubr.f32.gmra.mxu0 %v1827
  %v1933 = vpop.f32.mrf.mxu0
  %v1934 = vadd.f32 0.0, %v1933
  %v1935 = vpop.f32.mrf.mxu0
  %1936 = vmatprep.mubr.f32.mxu0 0.0
  %1937 = vmatmul.mubr.f32.gmra.mxu0 %v1828
  %v1938 = vpop.f32.mrf.mxu0
  %v1939 = vadd.f32 0.0, %v1938
  %v1940 = vpop.f32.mrf.mxu0
  %1941 = vmatprep.mubr.f32.mxu0 0.0
  %1942 = vmatmul.mubr.f32.gmra.mxu0 %v1829
  %v1943 = vpop.f32.mrf.mxu0
  %v1944 = vadd.f32 0.0, %v1943
  %v1945 = vpop.f32.mrf.mxu0
  %1946 = vmatprep.mubr.f32.mxu0 0.0
  %1947 = vmatmul.mubr.f32.gmra.mxu0 %v1830
  %v1948 = vpop.f32.mrf.mxu0
  %v1949 = vadd.f32 0.0, %v1948
  %v1950 = vpop.f32.mrf.mxu0
  %1951 = vmatprep.mubr.f32.mxu0 0.0
  %1952 = vmatmul.mubr.f32.gmra.mxu0 %v1831
  %v1953 = vpop.f32.mrf.mxu0
  %v1954 = vadd.f32 0.0, %v1953
  %v1955 = vpop.f32.mrf.mxu0
  %1956 = vmatprep.mubr.f32.mxu0 0.0
  %1957 = vmatmul.mubr.f32.gmra.mxu0 %v1832
  %v1958 = vpop.f32.mrf.mxu0
  %v1959 = vadd.f32 0.0, %v1958
  %v1960 = vpop.f32.mrf.mxu0
  %1961 = vmatprep.mubr.f32.mxu0 0.0
  %1962 = vmatmul.mubr.f32.gmra.mxu0 %v1833
  %v1963 = vpop.f32.mrf.mxu0
  %v1964 = vadd.f32 0.0, %v1963
  %v1965 = vpop.f32.mrf.mxu0
  %1966 = vmatprep.mubr.f32.mxu0 0.0
  %1967 = vmatmul.mubr.f32.gmra.mxu0 %v1834
  %v1968 = vpop.f32.mrf.mxu0
  %v1969 = vadd.f32 0.0, %v1968
  %v1970 = vpop.f32.mrf.mxu0
  %1971 = vdwg.mxu0
  %1972 = vmatprep.subr.mxu0 0.0
  %1973 = vmatpush1.msra.mxu0 %v1850
  %1974 = vmatprep.subr.mxu0 0.0
  %1975 = vmatpush1.msra.mxu0 %v1849
  %1976 = vmatprep.subr.mxu0 0.0
  %1977 = vmatpush1.msra.mxu0 %v1848
  %1978 = vmatprep.subr.mxu0 0.0
  %1979 = vmatpush1.msra.mxu0 %v1847
  %1980 = vmatprep.subr.mxu0 0.0
  %1981 = vmatpush1.msra.mxu0 %v1846
  %1982 = vmatprep.subr.mxu0 0.0
  %1983 = vmatpush1.msra.mxu0 %v1845
  %1984 = vmatprep.subr.mxu0 0.0
  %1985 = vmatpush1.msra.mxu0 %v1844
  %1986 = vmatprep.subr.mxu0 0.0
  %1987 = vmatpush1.msra.mxu0 %v1843
  %1988 = vmatprep.subr.mxu0 0.0
  %1989 = vmatpush1.msra.mxu0 %v1842
  %1990 = vmatprep.subr.mxu0 0.0
  %1991 = vmatpush1.msra.mxu0 %v1841
  %1992 = vmatprep.subr.mxu0 0.0
  %1993 = vmatpush1.msra.mxu0 %v1840
  %1994 = vmatprep.subr.mxu0 0.0
  %1995 = vmatpush1.msra.mxu0 %v1839
  %1996 = vmatprep.subr.mxu0 0.0
  %1997 = vmatpush1.msra.mxu0 %v1838
  %1998 = vmatprep.subr.mxu0 0.0
  %1999 = vmatpush1.msra.mxu0 %v1837
  %2000 = vmatprep.subr.mxu0 0.0
  %2001 = vmatpush1.msra.mxu0 %v1836
  %2002 = vmatprep.subr.mxu0 0.0
  %2003 = vmatpush1.msra.mxu0 %v1835
  %2004 = vmatprep.subr.mxu0 0.0
  %2005 = vmatpush2.msra.mxu0 0.0
  %2006 = vmatprep.subr.mxu0 0.0
  %2007 = vmatpush2.msra.mxu0 0.0
  %2008 = vmatprep.subr.mxu0 0.0
  %2009 = vmatpush2.msra.mxu0 0.0
  %2010 = vmatprep.subr.mxu0 0.0
  %2011 = vmatpush2.msra.mxu0 0.0
  %2012 = vmatprep.subr.mxu0 0.0
  %2013 = vmatpush2.msra.mxu0 0.0
  %2014 = vmatprep.subr.mxu0 0.0
  %2015 = vmatpush2.msra.mxu0 0.0
  %2016 = vmatprep.subr.mxu0 0.0
  %2017 = vmatpush2.msra.mxu0 0.0
  %2018 = vmatprep.subr.mxu0 0.0
  %2019 = vmatpush2.msra.mxu0 0.0
  %2020 = vmatprep.subr.mxu0 0.0
  %2021 = vmatpush2.msra.mxu0 0.0
  %2022 = vmatprep.subr.mxu0 0.0
  %2023 = vmatpush2.msra.mxu0 0.0
  %2024 = vmatprep.subr.mxu0 0.0
  %2025 = vmatpush2.msra.mxu0 0.0
  %2026 = vmatprep.subr.mxu0 0.0
  %2027 = vmatpush2.msra.mxu0 0.0
  %2028 = vmatprep.subr.mxu0 0.0
  %2029 = vmatpush2.msra.mxu0 0.0
  %2030 = vmatprep.subr.mxu0 0.0
  %2031 = vmatpush2.msra.mxu0 0.0
  %2032 = vmatprep.subr.mxu0 0.0
  %2033 = vmatpush2.msra.mxu0 0.0
  %2034 = vmatprep.subr.mxu0 0.0
  %2035 = vmatpush2.msra.mxu0 0.0
  %2036 = vmatprep.mubr.f32.mxu0 0.0
  %2037 = vmatmul.mubr.f32.gmra.mxu0 %v1795
  %v2038 = vpop.f32.mrf.mxu0
  %v2039 = vadd.f32 %v1934, %v2038
  %v2040 = vpop.f32.mrf.mxu0
  %2041 = vmatprep.mubr.f32.mxu0 0.0
  %2042 = vmatmul.mubr.f32.gmra.mxu0 %v1796
  %v2043 = vpop.f32.mrf.mxu0
  %v2044 = vadd.f32 %v1939, %v2043
  %v2045 = vpop.f32.mrf.mxu0
  %2046 = vmatprep.mubr.f32.mxu0 0.0
  %2047 = vmatmul.mubr.f32.gmra.mxu0 %v1797
  %v2048 = vpop.f32.mrf.mxu0
  %v2049 = vadd.f32 %v1944, %v2048
  %v2050 = vpop.f32.mrf.mxu0
  %2051 = vmatprep.mubr.f32.mxu0 0.0
  %2052 = vmatmul.mubr.f32.gmra.mxu0 %v1798
  %v2053 = vpop.f32.mrf.mxu0
  %v2054 = vadd.f32 %v1949, %v2053
  %v2055 = vpop.f32.mrf.mxu0
  %2056 = vmatprep.mubr.f32.mxu0 0.0
  %2057 = vmatmul.mubr.f32.gmra.mxu0 %v1799
  %v2058 = vpop.f32.mrf.mxu0
  %v2059 = vadd.f32 %v1954, %v2058
  %v2060 = vpop.f32.mrf.mxu0
  %2061 = vmatprep.mubr.f32.mxu0 0.0
  %2062 = vmatmul.mubr.f32.gmra.mxu0 %v1800
  %v2063 = vpop.f32.mrf.mxu0
  %v2064 = vadd.f32 %v1959, %v2063
  %v2065 = vpop.f32.mrf.mxu0
  %2066 = vmatprep.mubr.f32.mxu0 0.0
  %2067 = vmatmul.mubr.f32.gmra.mxu0 %v1801
  %v2068 = vpop.f32.mrf.mxu0
  %v2069 = vadd.f32 %v1964, %v2068
  %v2070 = vpop.f32.mrf.mxu0
  %2071 = vmatprep.mubr.f32.mxu0 0.0
  %2072 = vmatmul.mubr.f32.gmra.mxu0 %v1802
  %v2073 = vpop.f32.mrf.mxu0
  %v2074 = vadd.f32 %v1969, %v2073
  %v2075 = vpop.f32.mrf.mxu0
  %2076 = vdwg.mxu0
  %v2077 = vld [vmem:[%s4 + $0x2] sm:$0x1]
  %v2078 = vlaneseq
  %v2079 = vshrl.u32 %v2078, 7
  %v2080 = vsub.s32 0, %v2079
  %v2081 = vrot.slane %v2077, %v2080
  %v2082 = vadd.f32 %v2039, %v2081
  %v2083 = vadd.f32 %v2044, %v2081
  %v2084 = vadd.f32 %v2049, %v2081
  %v2085 = vadd.f32 %v2054, %v2081
  %v2086 = vadd.f32 %v2059, %v2081
  %v2087 = vadd.f32 %v2064, %v2081
  %v2088 = vadd.f32 %v2069, %v2081
  %v2089 = vadd.f32 %v2074, %v2081
  %2090 = vst [vmem:[%s5] sm:$0xff] %v2082
  %2091 = vst [vmem:[%s5 + $0x8] sm:$0xff] %v2083
  %2092 = vst [vmem:[%s5 + $0x10] sm:$0xff] %v2084
  %2093 = vst [vmem:[%s5 + $0x18] sm:$0xff] %v2085
  %2094 = vst [vmem:[%s5 + $0x20] sm:$0xff] %v2086
  %2095 = vst [vmem:[%s5 + $0x28] sm:$0xff] %v2087
  %2096 = vst [vmem:[%s5 + $0x30] sm:$0xff] %v2088
  %2097 = vst [vmem:[%s5 + $0x38] sm:$0xff] %v2089
  // Predicated region
  $region22: #{gru_clf_forward.1} parent=0 // pred_check
    _
  $region23: #{gru_clf_forward.1} parent=0 // pred_check_branch
    %2099 = sbr.rel (0) target = $region25
  $region24: #{gru_clf_forward.1} parent=0 // pred_region
    _
  $region25: #{gru_clf_forward.1} parent=0 // pred_fallthru
    _
  // Predicated region
  $region26: #{gru_clf_forward.1} parent=0 // pred_check
    _
  $region27: #{gru_clf_forward.1} parent=0 // pred_check_branch
    %2101 = sbr.rel (0) target = $region29
  $region28: #{gru_clf_forward.1} parent=0 // pred_region
    _
  $region29: #{gru_clf_forward.1} parent=0 // pred_fallthru
    _

</llo_original>
